<compile_context>
chip_gen: v6e
topology: v6e:2x2x1
jax: 0.10.0
libtpu: 0.0.40
codegen_flags: <defaults>
</compile_context>

<pallas_src>
from functools import partial

import jax
import jax.numpy as jnp
from jax import lax
from jax.experimental import pallas as pl
from jax.experimental.pallas import tpu as pltpu

EPS = 1e-5
_SQRT1_2 = 0.7071067811865476


def encoder_kernel(x_ref, pos_ref,
                   ln1_g_ref, ln1_b_ref, ln2_g_ref, ln2_b_ref,
                   wqkv_ref, bqkv_ref, wo_ref, bo_ref,
                   w1_ref, b1_ref, w2_ref, b2_ref,
                   o_ref,
                   qh_ref, kh_ref, vh_ref, attn_ref,
                   *, num_heads, seq_len, bt):
    M, E = x_ref.shape                     # M = bt * seq_len (batch-major rows)
    H, S = num_heads, seq_len
    D = E // H
    scale = 1.0 / (D ** 0.5)

    x = x_ref[...]                         # (M, E) f32
    pos = pos_ref[...]

    def layernorm(v, g, b):
        mu = jnp.mean(v, axis=-1, keepdims=True)
        var = jnp.mean((v - mu) ** 2, axis=-1, keepdims=True)
        return (v - mu) * lax.rsqrt(var + EPS) * g + b

    # ---- block 1: LN1 + self-attention + residual --------------------------
    h1 = x
    xn = layernorm(x, ln1_g_ref[...], ln1_b_ref[...])
    qk_in = xn + pos                       # q = k = LN(x) + pos ; v = LN(x)

    # Fused Q/K projection (one wide matmul); V projection separately.
    # Weight/bias refs are sliced statically (no full materialisation).
    qk = jnp.dot(qk_in, wqkv_ref[:, 0:2 * E],
                 preferred_element_type=jnp.float32) + bqkv_ref[:, 0:2 * E]
    vp = jnp.dot(xn, wqkv_ref[:, 2 * E:3 * E],
                 preferred_element_type=jnp.float32) + bqkv_ref[:, 2 * E:3 * E]

    # Scatter (M, E) -> (G, S, D) head-major scratch (static slice copies).
    for b in range(bt):
        rs = slice(b * S, (b + 1) * S)
        for hh in range(H):
            g = b * H + hh
            cq = slice(hh * D, (hh + 1) * D)
            ck = slice(E + hh * D, E + (hh + 1) * D)
            qh_ref[g] = qk[rs, cq]
            kh_ref[g] = qk[rs, ck]
            vh_ref[g] = vp[rs, cq]

    qh = qh_ref[...]
    kh = kh_ref[...]
    vh = vh_ref[...]

    # One batched contraction per stage (leading-batch dot_general on the MXU).
    scores = jnp.einsum('gsd,gtd->gst', qh, kh,
                        preferred_element_type=jnp.float32) * scale
    scores = scores - jnp.max(scores, axis=-1, keepdims=True)
    p = jnp.exp(scores)
    p = p * pl.reciprocal(jnp.sum(p, axis=-1, keepdims=True), approx=True)
    ctx = jnp.einsum('gst,gtd->gsd', p, vh,
                     preferred_element_type=jnp.float32)

    # Gather (G, S, D) -> (M, E).
    for b in range(bt):
        rs = slice(b * S, (b + 1) * S)
        for hh in range(H):
            attn_ref[rs, hh * D:(hh + 1) * D] = ctx[b * H + hh]

    attn = jnp.dot(attn_ref[...], wo_ref[...],
                   preferred_element_type=jnp.float32) + bo_ref[...]
    x1 = attn + h1

    # ---- block 2: LN2 + MLP (fc1 -> GELU -> fc2) + residual -----------------
    h2 = x1
    xn2 = layernorm(x1, ln2_g_ref[...], ln2_b_ref[...])
    y = jnp.dot(xn2, w1_ref[...], preferred_element_type=jnp.float32) + b1_ref[...]
    y = 0.5 * y * (1.0 + lax.erf(y * _SQRT1_2))        # exact GELU (nn.GELU default)
    y = jnp.dot(y, w2_ref[...], preferred_element_type=jnp.float32) + b2_ref[...]

    o_ref[...] = (y + h2).astype(o_ref.dtype)


def _pick_bt(batch, seq, target_rows=256, max_rows=4096):
    """Pick a batch tile: divisor of `batch` giving a large-but-bounded matmul M."""
    cands = [d for d in range(1, batch + 1)
             if batch % d == 0 and (d == batch or (d * seq) % 8 == 0)]
    for d in cands:                               # smallest tile reaching target M
        if target_rows <= d * seq <= max_rows:
            return d
    fitting = [d for d in cands if d * seq <= max_rows]
    if fitting:
        return fitting[-1]                        # as big as fits (whole batch when tiny)
    return cands[0]


def encoder_forward(x_sbe, pos_sbe, params, num_heads):
    """x_sbe, pos_sbe: (S, B, E), as in PyTorch nn.MultiheadAttention default."""
    S, B, E = x_sbe.shape
    Hd = params["fc1_w"].shape[0]                 # mlp hidden = 4*E
    D = E // num_heads
    Bt = _pick_bt(B, S)
    M = Bt * S
    G = Bt * num_heads

    # Flatten activations to a batch-major (B*S, E) slab so each grid step gets
    # one contiguous (Bt*S, E) matmul tile.
    x2d = jnp.transpose(x_sbe, (1, 0, 2)).reshape(B * S, E)
    pos2d = jnp.transpose(pos_sbe, (1, 0, 2)).reshape(B * S, E)

    # Pre-transpose linear weights so the kernel does y = x @ W_t + b.
    wqkv_t = params["in_proj_w"].T                # (E, 3E)
    bqkv = params["in_proj_b"][None, :]           # (1, 3E)
    wo_t = params["out_w"].T                      # (E, E)
    bo = params["out_b"][None, :]
    w1_t = params["fc1_w"].T                      # (E, Hd)
    b1 = params["fc1_b"][None, :]
    w2_t = params["fc2_w"].T                      # (Hd, E)
    b2 = params["fc2_b"][None, :]
    ln1_g = params["ln1_g"][None, :]
    ln1_b = params["ln1_b"][None, :]
    ln2_g = params["ln2_g"][None, :]
    ln2_b = params["ln2_b"][None, :]

    def rep(shape):                               # whole array, same block every step
        return pl.BlockSpec(shape, lambda b: (0,) * len(shape))

    tok_spec = pl.BlockSpec((M, E), lambda b: (b, 0))

    out2d = pl.pallas_call(
        partial(encoder_kernel, num_heads=num_heads, seq_len=S, bt=Bt),
        out_shape=jax.ShapeDtypeStruct((B * S, E), x_sbe.dtype),
        grid=(B // Bt,),
        in_specs=[
            tok_spec, tok_spec,
            rep((1, E)), rep((1, E)), rep((1, E)), rep((1, E)),
            rep((E, 3 * E)), rep((1, 3 * E)),
            rep((E, E)), rep((1, E)),
            rep((E, Hd)), rep((1, Hd)),
            rep((Hd, E)), rep((1, E)),
        ],
        out_specs=tok_spec,
        scratch_shapes=[
            pltpu.VMEM((G, S, D), jnp.float32),   # q heads
            pltpu.VMEM((G, S, D), jnp.float32),   # k heads
            pltpu.VMEM((G, S, D), jnp.float32),   # v heads
            pltpu.VMEM((M, E), jnp.float32),      # merged attention context
        ],
        compiler_params=pltpu.CompilerParams(dimension_semantics=("parallel",)),
    )(x2d, pos2d, ln1_g, ln1_b, ln2_g, ln2_b,
      wqkv_t, bqkv, wo_t, bo, w1_t, b1, w2_t, b2)

    return jnp.transpose(out2d.reshape(B, S, E), (1, 0, 2))   # back to (S, B, E)


def encoder_ref(x, pos, params, num_heads):
    """Pure-JAX reference matching PyTorch semantics (eval mode)."""
    def ln(v, g, b):
        mu = v.mean(-1, keepdims=True)
        var = ((v - mu) ** 2).mean(-1, keepdims=True)
        return (v - mu) / jnp.sqrt(var + EPS) * g + b

    S, B, E = x.shape
    D = E // num_heads
    h = x
    xn = ln(x, params["ln1_g"], params["ln1_b"])
    q = xn + pos
    wq, wk, wv = jnp.split(params["in_proj_w"], 3, axis=0)
    bq, bk, bv = jnp.split(params["in_proj_b"], 3)
    qp = q @ wq.T + bq
    kp = q @ wk.T + bk
    vp = xn @ wv.T + bv

    def heads(t):  # (S,B,E) -> (B*H, S, D) as in torch MHA
        return t.reshape(S, B * num_heads, D).transpose(1, 0, 2)

    qh, kh, vh = heads(qp), heads(kp), heads(vp)
    s = jnp.einsum("hsd,htd->hst", qh, kh) / jnp.sqrt(jnp.float32(D))
    p = jax.nn.softmax(s, axis=-1)
    o = jnp.einsum("hst,htd->hsd", p, vh)
    o = o.transpose(1, 0, 2).reshape(S, B, E)
    attn = o @ params["out_w"].T + params["out_b"]
    x = attn + h
    h = x
    xn = ln(x, params["ln2_g"], params["ln2_b"])
    y = xn @ params["fc1_w"].T + params["fc1_b"]
    y = 0.5 * y * (1.0 + lax.erf(y * _SQRT1_2))
    y = y @ params["fc2_w"].T + params["fc2_b"]
    return y + h


def make_params(key, embed_dim, mlp_ratio=4):
    hidden = embed_dim * mlp_ratio
    ks = jax.random.split(key, 8)
    n = lambda k, shape: (0.02 * jax.random.normal(k, shape)).astype(jnp.float32)
    return {
        "ln1_g": jnp.ones((embed_dim,), jnp.float32),
        "ln1_b": jnp.zeros((embed_dim,), jnp.float32),
        "ln2_g": jnp.ones((embed_dim,), jnp.float32),
        "ln2_b": jnp.zeros((embed_dim,), jnp.float32),
        "in_proj_w": n(ks[0], (3 * embed_dim, embed_dim)),
        "in_proj_b": n(ks[1], (3 * embed_dim,)),
        "out_w": n(ks[2], (embed_dim, embed_dim)),
        "out_b": n(ks[3], (embed_dim,)),
        "fc1_w": n(ks[4], (hidden, embed_dim)),
        "fc1_b": n(ks[5], (hidden,)),
        "fc2_w": n(ks[6], (embed_dim, hidden)),
        "fc2_b": n(ks[7], (embed_dim,)),
    }


if __name__ == "__main__":
    S, B, E, NUM_HEADS = 8, 2, 32, 4

    key = jax.random.PRNGKey(0)
    kx, kp, kw = jax.random.split(key, 3)
    x = jax.random.normal(kx, (S, B, E), dtype=jnp.float32)
    pos = jax.random.normal(kp, (S, B, E), dtype=jnp.float32)
    params = make_params(kw, E)

    out = encoder_forward(x, pos, params, NUM_HEADS)
    out = jax.block_until_ready(out)

    ref = encoder_ref(x, pos, params, NUM_HEADS)
    assert out.shape == (S, B, E)
    # 2e-4: approx-reciprocal softmax denominator (EUP) vs exact divide in the ref.
    assert jnp.allclose(out, ref, atol=2e-4, rtol=2e-4), "mismatch vs JAX reference"

    print("KERNEL_OK")
</pallas_src>

<mosaic_0001>
module attributes {stable_mosaic.version = 11 : i64} {
  func.func @encoder_kernel(%arg0: i32, %arg1: memref<16x32xf32, #tpu.memory_space<vmem>>, %arg2: memref<16x32xf32, #tpu.memory_space<vmem>>, %arg3: memref<1x32xf32, #tpu.memory_space<vmem>>, %arg4: memref<1x32xf32, #tpu.memory_space<vmem>>, %arg5: memref<1x32xf32, #tpu.memory_space<vmem>>, %arg6: memref<1x32xf32, #tpu.memory_space<vmem>>, %arg7: memref<32x96xf32, #tpu.memory_space<vmem>>, %arg8: memref<1x96xf32, #tpu.memory_space<vmem>>, %arg9: memref<32x32xf32, #tpu.memory_space<vmem>>, %arg10: memref<1x32xf32, #tpu.memory_space<vmem>>, %arg11: memref<32x128xf32, #tpu.memory_space<vmem>>, %arg12: memref<1x128xf32, #tpu.memory_space<vmem>>, %arg13: memref<128x32xf32, #tpu.memory_space<vmem>>, %arg14: memref<1x32xf32, #tpu.memory_space<vmem>>, %arg15: memref<16x32xf32, #tpu.memory_space<vmem>>, %arg16: memref<8x8x8xf32, #tpu.memory_space<vmem>>, %arg17: memref<8x8x8xf32, #tpu.memory_space<vmem>>, %arg18: memref<8x8x8xf32, #tpu.memory_space<vmem>>, %arg19: memref<16x32xf32, #tpu.memory_space<vmem>>) attributes {dimension_semantics = [#tpu.dimension_semantics<parallel>], iteration_bounds = array<i64: 1>, scalar_prefetch = 0 : i64, scratch_operands = 4 : i64, tpu.core_type = #tpu.core_type<tc>, window_params = [{transform_indices = @transform_0, window_bounds = array<i64: 16, 32>}, {transform_indices = @transform_1, window_bounds = array<i64: 16, 32>}, {pipeline_mode = #tpu.pipeline_mode<synchronous>, transform_indices = @transform_2, window_bounds = array<i64: 1, 32>}, {pipeline_mode = #tpu.pipeline_mode<synchronous>, transform_indices = @transform_3, window_bounds = array<i64: 1, 32>}, {pipeline_mode = #tpu.pipeline_mode<synchronous>, transform_indices = @transform_4, window_bounds = array<i64: 1, 32>}, {pipeline_mode = #tpu.pipeline_mode<synchronous>, transform_indices = @transform_5, window_bounds = array<i64: 1, 32>}, {pipeline_mode = #tpu.pipeline_mode<synchronous>, transform_indices = @transform_6, window_bounds = array<i64: 32, 96>}, {pipeline_mode = #tpu.pipeline_mode<synchronous>, transform_indices = @transform_7, window_bounds = array<i64: 1, 96>}, {pipeline_mode = #tpu.pipeline_mode<synchronous>, transform_indices = @transform_8, window_bounds = array<i64: 32, 32>}, {pipeline_mode = #tpu.pipeline_mode<synchronous>, transform_indices = @transform_9, window_bounds = array<i64: 1, 32>}, {pipeline_mode = #tpu.pipeline_mode<synchronous>, transform_indices = @transform_10, window_bounds = array<i64: 32, 128>}, {pipeline_mode = #tpu.pipeline_mode<synchronous>, transform_indices = @transform_11, window_bounds = array<i64: 1, 128>}, {pipeline_mode = #tpu.pipeline_mode<synchronous>, transform_indices = @transform_12, window_bounds = array<i64: 128, 32>}, {pipeline_mode = #tpu.pipeline_mode<synchronous>, transform_indices = @transform_13, window_bounds = array<i64: 1, 32>}, {transform_indices = @transform_14, window_bounds = array<i64: 16, 32>}]} {
    %c0 = arith.constant 0 : index
    %c0_0 = arith.constant 0 : index
    %0 = vector.load %arg1[%c0, %c0_0] : memref<16x32xf32, #tpu.memory_space<vmem>>, vector<16x32xf32>
    %c0_1 = arith.constant 0 : index
    %c0_2 = arith.constant 0 : index
    %1 = vector.load %arg2[%c0_1, %c0_2] : memref<16x32xf32, #tpu.memory_space<vmem>>, vector<16x32xf32>
    %c0_3 = arith.constant 0 : index
    %c0_4 = arith.constant 0 : index
    %2 = vector.load %arg3[%c0_3, %c0_4] : memref<1x32xf32, #tpu.memory_space<vmem>>, vector<1x32xf32>
    %c0_5 = arith.constant 0 : index
    %c0_6 = arith.constant 0 : index
    %3 = vector.load %arg4[%c0_5, %c0_6] : memref<1x32xf32, #tpu.memory_space<vmem>>, vector<1x32xf32>
    %cst = arith.constant dense<0.000000e+00> : vector<16xf32>
    %4 = vector.multi_reduction <add>, %0, %cst [1] : vector<16x32xf32> to vector<16xf32>
    %5 = vector.shape_cast %4 : vector<16xf32> to vector<16x1xf32>
    %cst_7 = arith.constant 3.200000e+01 : f32
    %6 = vector.broadcast %cst_7 : f32 to vector<16x1xf32>
    %7 = arith.divf %5, %6 : vector<16x1xf32>
    %8 = vector.broadcast %7 : vector<16x1xf32> to vector<16x32xf32>
    %9 = arith.subf %0, %8 : vector<16x32xf32>
    %10 = arith.mulf %9, %9 : vector<16x32xf32>
    %cst_8 = arith.constant dense<0.000000e+00> : vector<16xf32>
    %11 = vector.multi_reduction <add>, %10, %cst_8 [1] : vector<16x32xf32> to vector<16xf32>
    %12 = vector.shape_cast %11 : vector<16xf32> to vector<16x1xf32>
    %cst_9 = arith.constant 3.200000e+01 : f32
    %13 = vector.broadcast %cst_9 : f32 to vector<16x1xf32>
    %14 = arith.divf %12, %13 : vector<16x1xf32>
    %15 = vector.broadcast %7 : vector<16x1xf32> to vector<16x32xf32>
    %16 = arith.subf %0, %15 : vector<16x32xf32>
    %cst_10 = arith.constant 9.99999974E-6 : f32
    %17 = vector.broadcast %cst_10 : f32 to vector<16x1xf32>
    %18 = arith.addf %14, %17 : vector<16x1xf32>
    %19 = math.rsqrt %18 : vector<16x1xf32>
    %20 = vector.broadcast %19 : vector<16x1xf32> to vector<16x32xf32>
    %21 = arith.mulf %16, %20 : vector<16x32xf32>
    %22 = vector.broadcast %2 : vector<1x32xf32> to vector<16x32xf32>
    %23 = arith.mulf %21, %22 : vector<16x32xf32>
    %24 = vector.broadcast %3 : vector<1x32xf32> to vector<16x32xf32>
    %25 = arith.addf %23, %24 : vector<16x32xf32>
    %26 = arith.addf %25, %1 : vector<16x32xf32>
    %c0_11 = arith.constant 0 : index
    %c0_12 = arith.constant 0 : index
    %27 = vector.load %arg7[%c0_11, %c0_12] : memref<32x96xf32, #tpu.memory_space<vmem>>, vector<32x64xf32>
    %cst_13 = arith.constant dense<0.000000e+00> : vector<16x64xf32>
    %28 = tpu.matmul %26, %27, %cst_13 {dimension_numbers = #tpu.dot_dimension_numbers<[1], [0], [0], [1], [0, 0, 1, 1], [], []>} : vector<16x32xf32>, vector<32x64xf32>, vector<16x64xf32> -> vector<16x64xf32>
    %c0_14 = arith.constant 0 : index
    %c0_15 = arith.constant 0 : index
    %29 = vector.load %arg8[%c0_14, %c0_15] : memref<1x96xf32, #tpu.memory_space<vmem>>, vector<1x64xf32>
    %30 = vector.broadcast %29 : vector<1x64xf32> to vector<16x64xf32>
    %31 = arith.addf %28, %30 : vector<16x64xf32>
    %c0_16 = arith.constant 0 : index
    %c64 = arith.constant 64 : index
    %32 = vector.load %arg7[%c0_16, %c64] : memref<32x96xf32, #tpu.memory_space<vmem>>, vector<32x32xf32>
    %cst_17 = arith.constant dense<0.000000e+00> : vector<16x32xf32>
    %33 = tpu.matmul %25, %32, %cst_17 {dimension_numbers = #tpu.dot_dimension_numbers<[1], [0], [0], [1], [0, 0, 1, 1], [], []>} : vector<16x32xf32>, vector<32x32xf32>, vector<16x32xf32> -> vector<16x32xf32>
    %c0_18 = arith.constant 0 : index
    %c64_19 = arith.constant 64 : index
    %34 = vector.load %arg8[%c0_18, %c64_19] : memref<1x96xf32, #tpu.memory_space<vmem>>, vector<1x32xf32>
    %35 = vector.broadcast %34 : vector<1x32xf32> to vector<16x32xf32>
    %36 = arith.addf %33, %35 : vector<16x32xf32>
    %37 = vector.extract_strided_slice %31 {offsets = [0, 0], sizes = [8, 8], strides = [1, 1]} : vector<16x64xf32> to vector<8x8xf32>
    %c0_20 = arith.constant 0 : index
    %c0_21 = arith.constant 0 : index
    %c0_22 = arith.constant 0 : index
    %38 = vector.load %arg16[%c0_20, %c0_21, %c0_22] : memref<8x8x8xf32, #tpu.memory_space<vmem>>, vector<1x8x8xf32>
    %39 = vector.shape_cast %38 : vector<1x8x8xf32> to vector<8x8xf32>
    %40 = vector.shape_cast %37 : vector<8x8xf32> to vector<1x8x8xf32>
    tpu.vector_store %arg16[%c0_20, %c0_21, %c0_22], %40 {strides = array<i32>} : memref<8x8x8xf32, #tpu.memory_space<vmem>>, vector<1x8x8xf32>,
    %41 = vector.extract_strided_slice %31 {offsets = [0, 32], sizes = [8, 8], strides = [1, 1]} : vector<16x64xf32> to vector<8x8xf32>
    %c0_23 = arith.constant 0 : index
    %c0_24 = arith.constant 0 : index
    %c0_25 = arith.constant 0 : index
    %42 = vector.load %arg17[%c0_23, %c0_24, %c0_25] : memref<8x8x8xf32, #tpu.memory_space<vmem>>, vector<1x8x8xf32>
    %43 = vector.shape_cast %42 : vector<1x8x8xf32> to vector<8x8xf32>
    %44 = vector.shape_cast %41 : vector<8x8xf32> to vector<1x8x8xf32>
    tpu.vector_store %arg17[%c0_23, %c0_24, %c0_25], %44 {strides = array<i32>} : memref<8x8x8xf32, #tpu.memory_space<vmem>>, vector<1x8x8xf32>,
    %45 = vector.extract_strided_slice %36 {offsets = [0, 0], sizes = [8, 8], strides = [1, 1]} : vector<16x32xf32> to vector<8x8xf32>
    %c0_26 = arith.constant 0 : index
    %c0_27 = arith.constant 0 : index
    %c0_28 = arith.constant 0 : index
    %46 = vector.load %arg18[%c0_26, %c0_27, %c0_28] : memref<8x8x8xf32, #tpu.memory_space<vmem>>, vector<1x8x8xf32>
    %47 = vector.shape_cast %46 : vector<1x8x8xf32> to vector<8x8xf32>
    %48 = vector.shape_cast %45 : vector<8x8xf32> to vector<1x8x8xf32>
    tpu.vector_store %arg18[%c0_26, %c0_27, %c0_28], %48 {strides = array<i32>} : memref<8x8x8xf32, #tpu.memory_space<vmem>>, vector<1x8x8xf32>,
    %49 = vector.extract_strided_slice %31 {offsets = [0, 8], sizes = [8, 8], strides = [1, 1]} : vector<16x64xf32> to vector<8x8xf32>
    %c1 = arith.constant 1 : index
    %c0_29 = arith.constant 0 : index
    %c0_30 = arith.constant 0 : index
    %50 = vector.load %arg16[%c1, %c0_29, %c0_30] : memref<8x8x8xf32, #tpu.memory_space<vmem>>, vector<1x8x8xf32>
    %51 = vector.shape_cast %50 : vector<1x8x8xf32> to vector<8x8xf32>
    %52 = vector.shape_cast %49 : vector<8x8xf32> to vector<1x8x8xf32>
    tpu.vector_store %arg16[%c1, %c0_29, %c0_30], %52 {strides = array<i32>} : memref<8x8x8xf32, #tpu.memory_space<vmem>>, vector<1x8x8xf32>,
    %53 = vector.extract_strided_slice %31 {offsets = [0, 40], sizes = [8, 8], strides = [1, 1]} : vector<16x64xf32> to vector<8x8xf32>
    %c1_31 = arith.constant 1 : index
    %c0_32 = arith.constant 0 : index
    %c0_33 = arith.constant 0 : index
    %54 = vector.load %arg17[%c1_31, %c0_32, %c0_33] : memref<8x8x8xf32, #tpu.memory_space<vmem>>, vector<1x8x8xf32>
    %55 = vector.shape_cast %54 : vector<1x8x8xf32> to vector<8x8xf32>
    %56 = vector.shape_cast %53 : vector<8x8xf32> to vector<1x8x8xf32>
    tpu.vector_store %arg17[%c1_31, %c0_32, %c0_33], %56 {strides = array<i32>} : memref<8x8x8xf32, #tpu.memory_space<vmem>>, vector<1x8x8xf32>,
    %57 = vector.extract_strided_slice %36 {offsets = [0, 8], sizes = [8, 8], strides = [1, 1]} : vector<16x32xf32> to vector<8x8xf32>
    %c1_34 = arith.constant 1 : index
    %c0_35 = arith.constant 0 : index
    %c0_36 = arith.constant 0 : index
    %58 = vector.load %arg18[%c1_34, %c0_35, %c0_36] : memref<8x8x8xf32, #tpu.memory_space<vmem>>, vector<1x8x8xf32>
    %59 = vector.shape_cast %58 : vector<1x8x8xf32> to vector<8x8xf32>
    %60 = vector.shape_cast %57 : vector<8x8xf32> to vector<1x8x8xf32>
    tpu.vector_store %arg18[%c1_34, %c0_35, %c0_36], %60 {strides = array<i32>} : memref<8x8x8xf32, #tpu.memory_space<vmem>>, vector<1x8x8xf32>,
    %61 = vector.extract_strided_slice %31 {offsets = [0, 16], sizes = [8, 8], strides = [1, 1]} : vector<16x64xf32> to vector<8x8xf32>
    %c2 = arith.constant 2 : index
    %c0_37 = arith.constant 0 : index
    %c0_38 = arith.constant 0 : index
    %62 = vector.load %arg16[%c2, %c0_37, %c0_38] : memref<8x8x8xf32, #tpu.memory_space<vmem>>, vector<1x8x8xf32>
    %63 = vector.shape_cast %62 : vector<1x8x8xf32> to vector<8x8xf32>
    %64 = vector.shape_cast %61 : vector<8x8xf32> to vector<1x8x8xf32>
    tpu.vector_store %arg16[%c2, %c0_37, %c0_38], %64 {strides = array<i32>} : memref<8x8x8xf32, #tpu.memory_space<vmem>>, vector<1x8x8xf32>,
    %65 = vector.extract_strided_slice %31 {offsets = [0, 48], sizes = [8, 8], strides = [1, 1]} : vector<16x64xf32> to vector<8x8xf32>
    %c2_39 = arith.constant 2 : index
    %c0_40 = arith.constant 0 : index
    %c0_41 = arith.constant 0 : index
    %66 = vector.load %arg17[%c2_39, %c0_40, %c0_41] : memref<8x8x8xf32, #tpu.memory_space<vmem>>, vector<1x8x8xf32>
    %67 = vector.shape_cast %66 : vector<1x8x8xf32> to vector<8x8xf32>
    %68 = vector.shape_cast %65 : vector<8x8xf32> to vector<1x8x8xf32>
    tpu.vector_store %arg17[%c2_39, %c0_40, %c0_41], %68 {strides = array<i32>} : memref<8x8x8xf32, #tpu.memory_space<vmem>>, vector<1x8x8xf32>,
    %69 = vector.extract_strided_slice %36 {offsets = [0, 16], sizes = [8, 8], strides = [1, 1]} : vector<16x32xf32> to vector<8x8xf32>
    %c2_42 = arith.constant 2 : index
    %c0_43 = arith.constant 0 : index
    %c0_44 = arith.constant 0 : index
    %70 = vector.load %arg18[%c2_42, %c0_43, %c0_44] : memref<8x8x8xf32, #tpu.memory_space<vmem>>, vector<1x8x8xf32>
    %71 = vector.shape_cast %70 : vector<1x8x8xf32> to vector<8x8xf32>
    %72 = vector.shape_cast %69 : vector<8x8xf32> to vector<1x8x8xf32>
    tpu.vector_store %arg18[%c2_42, %c0_43, %c0_44], %72 {strides = array<i32>} : memref<8x8x8xf32, #tpu.memory_space<vmem>>, vector<1x8x8xf32>,
    %73 = vector.extract_strided_slice %31 {offsets = [0, 24], sizes = [8, 8], strides = [1, 1]} : vector<16x64xf32> to vector<8x8xf32>
    %c3 = arith.constant 3 : index
    %c0_45 = arith.constant 0 : index
    %c0_46 = arith.constant 0 : index
    %74 = vector.load %arg16[%c3, %c0_45, %c0_46] : memref<8x8x8xf32, #tpu.memory_space<vmem>>, vector<1x8x8xf32>
    %75 = vector.shape_cast %74 : vector<1x8x8xf32> to vector<8x8xf32>
    %76 = vector.shape_cast %73 : vector<8x8xf32> to vector<1x8x8xf32>
    tpu.vector_store %arg16[%c3, %c0_45, %c0_46], %76 {strides = array<i32>} : memref<8x8x8xf32, #tpu.memory_space<vmem>>, vector<1x8x8xf32>,
    %77 = vector.extract_strided_slice %31 {offsets = [0, 56], sizes = [8, 8], strides = [1, 1]} : vector<16x64xf32> to vector<8x8xf32>
    %c3_47 = arith.constant 3 : index
    %c0_48 = arith.constant 0 : index
    %c0_49 = arith.constant 0 : index
    %78 = vector.load %arg17[%c3_47, %c0_48, %c0_49] : memref<8x8x8xf32, #tpu.memory_space<vmem>>, vector<1x8x8xf32>
    %79 = vector.shape_cast %78 : vector<1x8x8xf32> to vector<8x8xf32>
    %80 = vector.shape_cast %77 : vector<8x8xf32> to vector<1x8x8xf32>
    tpu.vector_store %arg17[%c3_47, %c0_48, %c0_49], %80 {strides = array<i32>} : memref<8x8x8xf32, #tpu.memory_space<vmem>>, vector<1x8x8xf32>,
    %81 = vector.extract_strided_slice %36 {offsets = [0, 24], sizes = [8, 8], strides = [1, 1]} : vector<16x32xf32> to vector<8x8xf32>
    %c3_50 = arith.constant 3 : index
    %c0_51 = arith.constant 0 : index
    %c0_52 = arith.constant 0 : index
    %82 = vector.load %arg18[%c3_50, %c0_51, %c0_52] : memref<8x8x8xf32, #tpu.memory_space<vmem>>, vector<1x8x8xf32>
    %83 = vector.shape_cast %82 : vector<1x8x8xf32> to vector<8x8xf32>
    %84 = vector.shape_cast %81 : vector<8x8xf32> to vector<1x8x8xf32>
    tpu.vector_store %arg18[%c3_50, %c0_51, %c0_52], %84 {strides = array<i32>} : memref<8x8x8xf32, #tpu.memory_space<vmem>>, vector<1x8x8xf32>,
    %85 = vector.extract_strided_slice %31 {offsets = [8, 0], sizes = [8, 8], strides = [1, 1]} : vector<16x64xf32> to vector<8x8xf32>
    %c4 = arith.constant 4 : index
    %c0_53 = arith.constant 0 : index
    %c0_54 = arith.constant 0 : index
    %86 = vector.load %arg16[%c4, %c0_53, %c0_54] : memref<8x8x8xf32, #tpu.memory_space<vmem>>, vector<1x8x8xf32>
    %87 = vector.shape_cast %86 : vector<1x8x8xf32> to vector<8x8xf32>
    %88 = vector.shape_cast %85 : vector<8x8xf32> to vector<1x8x8xf32>
    tpu.vector_store %arg16[%c4, %c0_53, %c0_54], %88 {strides = array<i32>} : memref<8x8x8xf32, #tpu.memory_space<vmem>>, vector<1x8x8xf32>,
    %89 = vector.extract_strided_slice %31 {offsets = [8, 32], sizes = [8, 8], strides = [1, 1]} : vector<16x64xf32> to vector<8x8xf32>
    %c4_55 = arith.constant 4 : index
    %c0_56 = arith.constant 0 : index
    %c0_57 = arith.constant 0 : index
    %90 = vector.load %arg17[%c4_55, %c0_56, %c0_57] : memref<8x8x8xf32, #tpu.memory_space<vmem>>, vector<1x8x8xf32>
    %91 = vector.shape_cast %90 : vector<1x8x8xf32> to vector<8x8xf32>
    %92 = vector.shape_cast %89 : vector<8x8xf32> to vector<1x8x8xf32>
    tpu.vector_store %arg17[%c4_55, %c0_56, %c0_57], %92 {strides = array<i32>} : memref<8x8x8xf32, #tpu.memory_space<vmem>>, vector<1x8x8xf32>,
    %93 = vector.extract_strided_slice %36 {offsets = [8, 0], sizes = [8, 8], strides = [1, 1]} : vector<16x32xf32> to vector<8x8xf32>
    %c4_58 = arith.constant 4 : index
    %c0_59 = arith.constant 0 : index
    %c0_60 = arith.constant 0 : index
    %94 = vector.load %arg18[%c4_58, %c0_59, %c0_60] : memref<8x8x8xf32, #tpu.memory_space<vmem>>, vector<1x8x8xf32>
    %95 = vector.shape_cast %94 : vector<1x8x8xf32> to vector<8x8xf32>
    %96 = vector.shape_cast %93 : vector<8x8xf32> to vector<1x8x8xf32>
    tpu.vector_store %arg18[%c4_58, %c0_59, %c0_60], %96 {strides = array<i32>} : memref<8x8x8xf32, #tpu.memory_space<vmem>>, vector<1x8x8xf32>,
    %97 = vector.extract_strided_slice %31 {offsets = [8, 8], sizes = [8, 8], strides = [1, 1]} : vector<16x64xf32> to vector<8x8xf32>
    %c5 = arith.constant 5 : index
    %c0_61 = arith.constant 0 : index
    %c0_62 = arith.constant 0 : index
    %98 = vector.load %arg16[%c5, %c0_61, %c0_62] : memref<8x8x8xf32, #tpu.memory_space<vmem>>, vector<1x8x8xf32>
    %99 = vector.shape_cast %98 : vector<1x8x8xf32> to vector<8x8xf32>
    %100 = vector.shape_cast %97 : vector<8x8xf32> to vector<1x8x8xf32>
    tpu.vector_store %arg16[%c5, %c0_61, %c0_62], %100 {strides = array<i32>} : memref<8x8x8xf32, #tpu.memory_space<vmem>>, vector<1x8x8xf32>,
    %101 = vector.extract_strided_slice %31 {offsets = [8, 40], sizes = [8, 8], strides = [1, 1]} : vector<16x64xf32> to vector<8x8xf32>
    %c5_63 = arith.constant 5 : index
    %c0_64 = arith.constant 0 : index
    %c0_65 = arith.constant 0 : index
    %102 = vector.load %arg17[%c5_63, %c0_64, %c0_65] : memref<8x8x8xf32, #tpu.memory_space<vmem>>, vector<1x8x8xf32>
    %103 = vector.shape_cast %102 : vector<1x8x8xf32> to vector<8x8xf32>
    %104 = vector.shape_cast %101 : vector<8x8xf32> to vector<1x8x8xf32>
    tpu.vector_store %arg17[%c5_63, %c0_64, %c0_65], %104 {strides = array<i32>} : memref<8x8x8xf32, #tpu.memory_space<vmem>>, vector<1x8x8xf32>,
    %105 = vector.extract_strided_slice %36 {offsets = [8, 8], sizes = [8, 8], strides = [1, 1]} : vector<16x32xf32> to vector<8x8xf32>
    %c5_66 = arith.constant 5 : index
    %c0_67 = arith.constant 0 : index
    %c0_68 = arith.constant 0 : index
    %106 = vector.load %arg18[%c5_66, %c0_67, %c0_68] : memref<8x8x8xf32, #tpu.memory_space<vmem>>, vector<1x8x8xf32>
    %107 = vector.shape_cast %106 : vector<1x8x8xf32> to vector<8x8xf32>
    %108 = vector.shape_cast %105 : vector<8x8xf32> to vector<1x8x8xf32>
    tpu.vector_store %arg18[%c5_66, %c0_67, %c0_68], %108 {strides = array<i32>} : memref<8x8x8xf32, #tpu.memory_space<vmem>>, vector<1x8x8xf32>,
    %109 = vector.extract_strided_slice %31 {offsets = [8, 16], sizes = [8, 8], strides = [1, 1]} : vector<16x64xf32> to vector<8x8xf32>
    %c6 = arith.constant 6 : index
    %c0_69 = arith.constant 0 : index
    %c0_70 = arith.constant 0 : index
    %110 = vector.load %arg16[%c6, %c0_69, %c0_70] : memref<8x8x8xf32, #tpu.memory_space<vmem>>, vector<1x8x8xf32>
    %111 = vector.shape_cast %110 : vector<1x8x8xf32> to vector<8x8xf32>
    %112 = vector.shape_cast %109 : vector<8x8xf32> to vector<1x8x8xf32>
    tpu.vector_store %arg16[%c6, %c0_69, %c0_70], %112 {strides = array<i32>} : memref<8x8x8xf32, #tpu.memory_space<vmem>>, vector<1x8x8xf32>,
    %113 = vector.extract_strided_slice %31 {offsets = [8, 48], sizes = [8, 8], strides = [1, 1]} : vector<16x64xf32> to vector<8x8xf32>
    %c6_71 = arith.constant 6 : index
    %c0_72 = arith.constant 0 : index
    %c0_73 = arith.constant 0 : index
    %114 = vector.load %arg17[%c6_71, %c0_72, %c0_73] : memref<8x8x8xf32, #tpu.memory_space<vmem>>, vector<1x8x8xf32>
    %115 = vector.shape_cast %114 : vector<1x8x8xf32> to vector<8x8xf32>
    %116 = vector.shape_cast %113 : vector<8x8xf32> to vector<1x8x8xf32>
    tpu.vector_store %arg17[%c6_71, %c0_72, %c0_73], %116 {strides = array<i32>} : memref<8x8x8xf32, #tpu.memory_space<vmem>>, vector<1x8x8xf32>,
    %117 = vector.extract_strided_slice %36 {offsets = [8, 16], sizes = [8, 8], strides = [1, 1]} : vector<16x32xf32> to vector<8x8xf32>
    %c6_74 = arith.constant 6 : index
    %c0_75 = arith.constant 0 : index
    %c0_76 = arith.constant 0 : index
    %118 = vector.load %arg18[%c6_74, %c0_75, %c0_76] : memref<8x8x8xf32, #tpu.memory_space<vmem>>, vector<1x8x8xf32>
    %119 = vector.shape_cast %118 : vector<1x8x8xf32> to vector<8x8xf32>
    %120 = vector.shape_cast %117 : vector<8x8xf32> to vector<1x8x8xf32>
    tpu.vector_store %arg18[%c6_74, %c0_75, %c0_76], %120 {strides = array<i32>} : memref<8x8x8xf32, #tpu.memory_space<vmem>>, vector<1x8x8xf32>,
    %121 = vector.extract_strided_slice %31 {offsets = [8, 24], sizes = [8, 8], strides = [1, 1]} : vector<16x64xf32> to vector<8x8xf32>
    %c7 = arith.constant 7 : index
    %c0_77 = arith.constant 0 : index
    %c0_78 = arith.constant 0 : index
    %122 = vector.load %arg16[%c7, %c0_77, %c0_78] : memref<8x8x8xf32, #tpu.memory_space<vmem>>, vector<1x8x8xf32>
    %123 = vector.shape_cast %122 : vector<1x8x8xf32> to vector<8x8xf32>
    %124 = vector.shape_cast %121 : vector<8x8xf32> to vector<1x8x8xf32>
    tpu.vector_store %arg16[%c7, %c0_77, %c0_78], %124 {strides = array<i32>} : memref<8x8x8xf32, #tpu.memory_space<vmem>>, vector<1x8x8xf32>,
    %125 = vector.extract_strided_slice %31 {offsets = [8, 56], sizes = [8, 8], strides = [1, 1]} : vector<16x64xf32> to vector<8x8xf32>
    %c7_79 = arith.constant 7 : index
    %c0_80 = arith.constant 0 : index
    %c0_81 = arith.constant 0 : index
    %126 = vector.load %arg17[%c7_79, %c0_80, %c0_81] : memref<8x8x8xf32, #tpu.memory_space<vmem>>, vector<1x8x8xf32>
    %127 = vector.shape_cast %126 : vector<1x8x8xf32> to vector<8x8xf32>
    %128 = vector.shape_cast %125 : vector<8x8xf32> to vector<1x8x8xf32>
    tpu.vector_store %arg17[%c7_79, %c0_80, %c0_81], %128 {strides = array<i32>} : memref<8x8x8xf32, #tpu.memory_space<vmem>>, vector<1x8x8xf32>,
    %129 = vector.extract_strided_slice %36 {offsets = [8, 24], sizes = [8, 8], strides = [1, 1]} : vector<16x32xf32> to vector<8x8xf32>
    %c7_82 = arith.constant 7 : index
    %c0_83 = arith.constant 0 : index
    %c0_84 = arith.constant 0 : index
    %130 = vector.load %arg18[%c7_82, %c0_83, %c0_84] : memref<8x8x8xf32, #tpu.memory_space<vmem>>, vector<1x8x8xf32>
    %131 = vector.shape_cast %130 : vector<1x8x8xf32> to vector<8x8xf32>
    %132 = vector.shape_cast %129 : vector<8x8xf32> to vector<1x8x8xf32>
    tpu.vector_store %arg18[%c7_82, %c0_83, %c0_84], %132 {strides = array<i32>} : memref<8x8x8xf32, #tpu.memory_space<vmem>>, vector<1x8x8xf32>,
    %c0_85 = arith.constant 0 : index
    %c0_86 = arith.constant 0 : index
    %c0_87 = arith.constant 0 : index
    %133 = vector.load %arg16[%c0_85, %c0_86, %c0_87] : memref<8x8x8xf32, #tpu.memory_space<vmem>>, vector<8x8x8xf32>
    %c0_88 = arith.constant 0 : index
    %c0_89 = arith.constant 0 : index
    %c0_90 = arith.constant 0 : index
    %134 = vector.load %arg17[%c0_88, %c0_89, %c0_90] : memref<8x8x8xf32, #tpu.memory_space<vmem>>, vector<8x8x8xf32>
    %c0_91 = arith.constant 0 : index
    %c0_92 = arith.constant 0 : index
    %c0_93 = arith.constant 0 : index
    %135 = vector.load %arg18[%c0_91, %c0_92, %c0_93] : memref<8x8x8xf32, #tpu.memory_space<vmem>>, vector<8x8x8xf32>
    "tpu.trace_start"() <{level = 10 : i32, message = "gsd,gtd->gst"}> : () -> ()
    %cst_94 = arith.constant dense<0.000000e+00> : vector<8x8x8xf32>
    %136 = tpu.matmul %133, %134, %cst_94 {dimension_numbers = #tpu.dot_dimension_numbers<[2], [2], [1], [1], [0, 0, 0, 1, 1, 1], [0], [0]>} : vector<8x8x8xf32>, vector<8x8x8xf32>, vector<8x8x8xf32> -> vector<8x8x8xf32>
    "tpu.trace_stop"() : () -> ()
    %cst_95 = arith.constant 0.353553385 : f32
    %137 = vector.broadcast %cst_95 : f32 to vector<8x8x8xf32>
    %138 = arith.mulf %136, %137 : vector<8x8x8xf32>
    %cst_96 = arith.constant dense<0xFF800000> : vector<8x8xf32>
    %139 = vector.multi_reduction <maximumf>, %138, %cst_96 [2] : vector<8x8x8xf32> to vector<8x8xf32>
    %140 = vector.shape_cast %139 : vector<8x8xf32> to vector<8x8x1xf32>
    %141 = vector.broadcast %140 : vector<8x8x1xf32> to vector<8x8x8xf32>
    %142 = arith.subf %138, %141 : vector<8x8x8xf32>
    %143 = math.exp %142 : vector<8x8x8xf32>
    %cst_97 = arith.constant dense<0.000000e+00> : vector<8x8xf32>
    %144 = vector.multi_reduction <add>, %143, %cst_97 [2] : vector<8x8x8xf32> to vector<8x8xf32>
    %145 = vector.shape_cast %144 : vector<8x8xf32> to vector<8x8x1xf32>
    %146 = tpu.reciprocal %145 {approx = true} : vector<8x8x1xf32> -> vector<8x8x1xf32>
    %147 = vector.broadcast %146 : vector<8x8x1xf32> to vector<8x8x8xf32>
    %148 = arith.mulf %143, %147 : vector<8x8x8xf32>
    "tpu.trace_start"() <{level = 10 : i32, message = "gst,gtd->gsd"}> : () -> ()
    %cst_98 = arith.constant dense<0.000000e+00> : vector<8x8x8xf32>
    %149 = tpu.matmul %148, %135, %cst_98 {dimension_numbers = #tpu.dot_dimension_numbers<[2], [1], [1], [2], [0, 0, 0, 1, 1, 2], [0], [0]>} : vector<8x8x8xf32>, vector<8x8x8xf32>, vector<8x8x8xf32> -> vector<8x8x8xf32>
    "tpu.trace_stop"() : () -> ()
    %150 = vector.extract_strided_slice %149 {offsets = [0, 0, 0], sizes = [1, 8, 8], strides = [1, 1, 1]} : vector<8x8x8xf32> to vector<1x8x8xf32>
    %151 = vector.shape_cast %150 : vector<1x8x8xf32> to vector<8x8xf32>
    %c0_99 = arith.constant 0 : index
    %c0_100 = arith.constant 0 : index
    %152 = vector.load %arg19[%c0_99, %c0_100] : memref<16x32xf32, #tpu.memory_space<vmem>>, vector<8x8xf32>
    tpu.vector_store %arg19[%c0_99, %c0_100], %151 {strides = array<i32>} : memref<16x32xf32, #tpu.memory_space<vmem>>, vector<8x8xf32>,
    %153 = vector.extract_strided_slice %149 {offsets = [1, 0, 0], sizes = [1, 8, 8], strides = [1, 1, 1]} : vector<8x8x8xf32> to vector<1x8x8xf32>
    %154 = vector.shape_cast %153 : vector<1x8x8xf32> to vector<8x8xf32>
    %c0_101 = arith.constant 0 : index
    %c8 = arith.constant 8 : index
    %155 = vector.load %arg19[%c0_101, %c8] : memref<16x32xf32, #tpu.memory_space<vmem>>, vector<8x8xf32>
    tpu.vector_store %arg19[%c0_101, %c8], %154 {strides = array<i32>} : memref<16x32xf32, #tpu.memory_space<vmem>>, vector<8x8xf32>,
    %156 = vector.extract_strided_slice %149 {offsets = [2, 0, 0], sizes = [1, 8, 8], strides = [1, 1, 1]} : vector<8x8x8xf32> to vector<1x8x8xf32>
    %157 = vector.shape_cast %156 : vector<1x8x8xf32> to vector<8x8xf32>
    %c0_102 = arith.constant 0 : index
    %c16 = arith.constant 16 : index
    %158 = vector.load %arg19[%c0_102, %c16] : memref<16x32xf32, #tpu.memory_space<vmem>>, vector<8x8xf32>
    tpu.vector_store %arg19[%c0_102, %c16], %157 {strides = array<i32>} : memref<16x32xf32, #tpu.memory_space<vmem>>, vector<8x8xf32>,
    %159 = vector.extract_strided_slice %149 {offsets = [3, 0, 0], sizes = [1, 8, 8], strides = [1, 1, 1]} : vector<8x8x8xf32> to vector<1x8x8xf32>
    %160 = vector.shape_cast %159 : vector<1x8x8xf32> to vector<8x8xf32>
    %c0_103 = arith.constant 0 : index
    %c24 = arith.constant 24 : index
    %161 = vector.load %arg19[%c0_103, %c24] : memref<16x32xf32, #tpu.memory_space<vmem>>, vector<8x8xf32>
    tpu.vector_store %arg19[%c0_103, %c24], %160 {strides = array<i32>} : memref<16x32xf32, #tpu.memory_space<vmem>>, vector<8x8xf32>,
    %162 = vector.extract_strided_slice %149 {offsets = [4, 0, 0], sizes = [1, 8, 8], strides = [1, 1, 1]} : vector<8x8x8xf32> to vector<1x8x8xf32>
    %163 = vector.shape_cast %162 : vector<1x8x8xf32> to vector<8x8xf32>
    %c8_104 = arith.constant 8 : index
    %c0_105 = arith.constant 0 : index
    %164 = vector.load %arg19[%c8_104, %c0_105] : memref<16x32xf32, #tpu.memory_space<vmem>>, vector<8x8xf32>
    tpu.vector_store %arg19[%c8_104, %c0_105], %163 {strides = array<i32>} : memref<16x32xf32, #tpu.memory_space<vmem>>, vector<8x8xf32>,
    %165 = vector.extract_strided_slice %149 {offsets = [5, 0, 0], sizes = [1, 8, 8], strides = [1, 1, 1]} : vector<8x8x8xf32> to vector<1x8x8xf32>
    %166 = vector.shape_cast %165 : vector<1x8x8xf32> to vector<8x8xf32>
    %c8_106 = arith.constant 8 : index
    %c8_107 = arith.constant 8 : index
    %167 = vector.load %arg19[%c8_106, %c8_107] : memref<16x32xf32, #tpu.memory_space<vmem>>, vector<8x8xf32>
    tpu.vector_store %arg19[%c8_106, %c8_107], %166 {strides = array<i32>} : memref<16x32xf32, #tpu.memory_space<vmem>>, vector<8x8xf32>,
    %168 = vector.extract_strided_slice %149 {offsets = [6, 0, 0], sizes = [1, 8, 8], strides = [1, 1, 1]} : vector<8x8x8xf32> to vector<1x8x8xf32>
    %169 = vector.shape_cast %168 : vector<1x8x8xf32> to vector<8x8xf32>
    %c8_108 = arith.constant 8 : index
    %c16_109 = arith.constant 16 : index
    %170 = vector.load %arg19[%c8_108, %c16_109] : memref<16x32xf32, #tpu.memory_space<vmem>>, vector<8x8xf32>
    tpu.vector_store %arg19[%c8_108, %c16_109], %169 {strides = array<i32>} : memref<16x32xf32, #tpu.memory_space<vmem>>, vector<8x8xf32>,
    %171 = vector.extract_strided_slice %149 {offsets = [7, 0, 0], sizes = [1, 8, 8], strides = [1, 1, 1]} : vector<8x8x8xf32> to vector<1x8x8xf32>
    %172 = vector.shape_cast %171 : vector<1x8x8xf32> to vector<8x8xf32>
    %c8_110 = arith.constant 8 : index
    %c24_111 = arith.constant 24 : index
    %173 = vector.load %arg19[%c8_110, %c24_111] : memref<16x32xf32, #tpu.memory_space<vmem>>, vector<8x8xf32>
    tpu.vector_store %arg19[%c8_110, %c24_111], %172 {strides = array<i32>} : memref<16x32xf32, #tpu.memory_space<vmem>>, vector<8x8xf32>,
    %c0_112 = arith.constant 0 : index
    %c0_113 = arith.constant 0 : index
    %174 = vector.load %arg19[%c0_112, %c0_113] : memref<16x32xf32, #tpu.memory_space<vmem>>, vector<16x32xf32>
    %c0_114 = arith.constant 0 : index
    %c0_115 = arith.constant 0 : index
    %175 = vector.load %arg9[%c0_114, %c0_115] : memref<32x32xf32, #tpu.memory_space<vmem>>, vector<32x32xf32>
    %cst_116 = arith.constant dense<0.000000e+00> : vector<16x32xf32>
    %176 = tpu.matmul %174, %175, %cst_116 {dimension_numbers = #tpu.dot_dimension_numbers<[1], [0], [0], [1], [0, 0, 1, 1], [], []>} : vector<16x32xf32>, vector<32x32xf32>, vector<16x32xf32> -> vector<16x32xf32>
    %c0_117 = arith.constant 0 : index
    %c0_118 = arith.constant 0 : index
    %177 = vector.load %arg10[%c0_117, %c0_118] : memref<1x32xf32, #tpu.memory_space<vmem>>, vector<1x32xf32>
    %178 = vector.broadcast %177 : vector<1x32xf32> to vector<16x32xf32>
    %179 = arith.addf %176, %178 : vector<16x32xf32>
    %180 = arith.addf %179, %0 : vector<16x32xf32>
    %c0_119 = arith.constant 0 : index
    %c0_120 = arith.constant 0 : index
    %181 = vector.load %arg5[%c0_119, %c0_120] : memref<1x32xf32, #tpu.memory_space<vmem>>, vector<1x32xf32>
    %c0_121 = arith.constant 0 : index
    %c0_122 = arith.constant 0 : index
    %182 = vector.load %arg6[%c0_121, %c0_122] : memref<1x32xf32, #tpu.memory_space<vmem>>, vector<1x32xf32>
    %cst_123 = arith.constant dense<0.000000e+00> : vector<16xf32>
    %183 = vector.multi_reduction <add>, %180, %cst_123 [1] : vector<16x32xf32> to vector<16xf32>
    %184 = vector.shape_cast %183 : vector<16xf32> to vector<16x1xf32>
    %cst_124 = arith.constant 3.200000e+01 : f32
    %185 = vector.broadcast %cst_124 : f32 to vector<16x1xf32>
    %186 = arith.divf %184, %185 : vector<16x1xf32>
    %187 = vector.broadcast %186 : vector<16x1xf32> to vector<16x32xf32>
    %188 = arith.subf %180, %187 : vector<16x32xf32>
    %189 = arith.mulf %188, %188 : vector<16x32xf32>
    %cst_125 = arith.constant dense<0.000000e+00> : vector<16xf32>
    %190 = vector.multi_reduction <add>, %189, %cst_125 [1] : vector<16x32xf32> to vector<16xf32>
    %191 = vector.shape_cast %190 : vector<16xf32> to vector<16x1xf32>
    %cst_126 = arith.constant 3.200000e+01 : f32
    %192 = vector.broadcast %cst_126 : f32 to vector<16x1xf32>
    %193 = arith.divf %191, %192 : vector<16x1xf32>
    %194 = vector.broadcast %186 : vector<16x1xf32> to vector<16x32xf32>
    %195 = arith.subf %180, %194 : vector<16x32xf32>
    %cst_127 = arith.constant 9.99999974E-6 : f32
    %196 = vector.broadcast %cst_127 : f32 to vector<16x1xf32>
    %197 = arith.addf %193, %196 : vector<16x1xf32>
    %198 = math.rsqrt %197 : vector<16x1xf32>
    %199 = vector.broadcast %198 : vector<16x1xf32> to vector<16x32xf32>
    %200 = arith.mulf %195, %199 : vector<16x32xf32>
    %201 = vector.broadcast %181 : vector<1x32xf32> to vector<16x32xf32>
    %202 = arith.mulf %200, %201 : vector<16x32xf32>
    %203 = vector.broadcast %182 : vector<1x32xf32> to vector<16x32xf32>
    %204 = arith.addf %202, %203 : vector<16x32xf32>
    %c0_128 = arith.constant 0 : index
    %c0_129 = arith.constant 0 : index
    %205 = vector.load %arg11[%c0_128, %c0_129] : memref<32x128xf32, #tpu.memory_space<vmem>>, vector<32x128xf32>
    %cst_130 = arith.constant dense<0.000000e+00> : vector<16x128xf32>
    %206 = tpu.matmul %204, %205, %cst_130 {dimension_numbers = #tpu.dot_dimension_numbers<[1], [0], [0], [1], [0, 0, 1, 1], [], []>} : vector<16x32xf32>, vector<32x128xf32>, vector<16x128xf32> -> vector<16x128xf32>
    %c0_131 = arith.constant 0 : index
    %c0_132 = arith.constant 0 : index
    %207 = vector.load %arg12[%c0_131, %c0_132] : memref<1x128xf32, #tpu.memory_space<vmem>>, vector<1x128xf32>
    %208 = vector.broadcast %207 : vector<1x128xf32> to vector<16x128xf32>
    %209 = arith.addf %206, %208 : vector<16x128xf32>
    %cst_133 = arith.constant 5.000000e-01 : f32
    %210 = vector.broadcast %cst_133 : f32 to vector<16x128xf32>
    %211 = arith.mulf %210, %209 : vector<16x128xf32>
    %cst_134 = arith.constant 0.707106769 : f32
    %212 = vector.broadcast %cst_134 : f32 to vector<16x128xf32>
    %213 = arith.mulf %209, %212 : vector<16x128xf32>
    %214 = math.erf %213 : vector<16x128xf32>
    %cst_135 = arith.constant 1.000000e+00 : f32
    %215 = vector.broadcast %cst_135 : f32 to vector<16x128xf32>
    %216 = arith.addf %215, %214 : vector<16x128xf32>
    %217 = arith.mulf %211, %216 : vector<16x128xf32>
    %c0_136 = arith.constant 0 : index
    %c0_137 = arith.constant 0 : index
    %218 = vector.load %arg13[%c0_136, %c0_137] : memref<128x32xf32, #tpu.memory_space<vmem>>, vector<128x32xf32>
    %cst_138 = arith.constant dense<0.000000e+00> : vector<16x32xf32>
    %219 = tpu.matmul %217, %218, %cst_138 {dimension_numbers = #tpu.dot_dimension_numbers<[1], [0], [0], [1], [0, 0, 1, 1], [], []>} : vector<16x128xf32>, vector<128x32xf32>, vector<16x32xf32> -> vector<16x32xf32>
    %c0_139 = arith.constant 0 : index
    %c0_140 = arith.constant 0 : index
    %220 = vector.load %arg14[%c0_139, %c0_140] : memref<1x32xf32, #tpu.memory_space<vmem>>, vector<1x32xf32>
    %221 = vector.broadcast %220 : vector<1x32xf32> to vector<16x32xf32>
    %222 = arith.addf %219, %221 : vector<16x32xf32>
    %223 = arith.addf %222, %180 : vector<16x32xf32>
    %c0_141 = arith.constant 0 : index
    %c0_142 = arith.constant 0 : index
    %224 = vector.load %arg15[%c0_141, %c0_142] : memref<16x32xf32, #tpu.memory_space<vmem>>, vector<16x32xf32>
    tpu.vector_store %arg15[%c0_141, %c0_142], %223 {strides = array<i32>} : memref<16x32xf32, #tpu.memory_space<vmem>>, vector<16x32xf32>,
    return
  }
  func.func @transform_0(%arg0: i32) -> (i32, i32) {
    %c0_i32 = arith.constant 0 : i32
    %c0_i32_0 = arith.constant 0 : i32
    return %arg0, %c0_i32 : i32, i32
  }
  func.func @transform_1(%arg0: i32) -> (i32, i32) {
    %c0_i32 = arith.constant 0 : i32
    %c0_i32_0 = arith.constant 0 : i32
    return %arg0, %c0_i32 : i32, i32
  }
  func.func @transform_2(%arg0: i32) -> (i32, i32) {
    %c0_i32 = arith.constant 0 : i32
    %c0_i32_0 = arith.constant 0 : i32
    %c0_i32_1 = arith.constant 0 : i32
    return %c0_i32, %c0_i32_0 : i32, i32
  }
  func.func @transform_3(%arg0: i32) -> (i32, i32) {
    %c0_i32 = arith.constant 0 : i32
    %c0_i32_0 = arith.constant 0 : i32
    %c0_i32_1 = arith.constant 0 : i32
    return %c0_i32, %c0_i32_0 : i32, i32
  }
  func.func @transform_4(%arg0: i32) -> (i32, i32) {
    %c0_i32 = arith.constant 0 : i32
    %c0_i32_0 = arith.constant 0 : i32
    %c0_i32_1 = arith.constant 0 : i32
    return %c0_i32, %c0_i32_0 : i32, i32
  }
  func.func @transform_5(%arg0: i32) -> (i32, i32) {
    %c0_i32 = arith.constant 0 : i32
    %c0_i32_0 = arith.constant 0 : i32
    %c0_i32_1 = arith.constant 0 : i32
    return %c0_i32, %c0_i32_0 : i32, i32
  }
  func.func @transform_6(%arg0: i32) -> (i32, i32) {
    %c0_i32 = arith.constant 0 : i32
    %c0_i32_0 = arith.constant 0 : i32
    %c0_i32_1 = arith.constant 0 : i32
    return %c0_i32, %c0_i32_0 : i32, i32
  }
  func.func @transform_7(%arg0: i32) -> (i32, i32) {
    %c0_i32 = arith.constant 0 : i32
    %c0_i32_0 = arith.constant 0 : i32
    %c0_i32_1 = arith.constant 0 : i32
    return %c0_i32, %c0_i32_0 : i32, i32
  }
  func.func @transform_8(%arg0: i32) -> (i32, i32) {
    %c0_i32 = arith.constant 0 : i32
    %c0_i32_0 = arith.constant 0 : i32
    %c0_i32_1 = arith.constant 0 : i32
    return %c0_i32, %c0_i32_0 : i32, i32
  }
  func.func @transform_9(%arg0: i32) -> (i32, i32) {
    %c0_i32 = arith.constant 0 : i32
    %c0_i32_0 = arith.constant 0 : i32
    %c0_i32_1 = arith.constant 0 : i32
    return %c0_i32, %c0_i32_0 : i32, i32
  }
  func.func @transform_10(%arg0: i32) -> (i32, i32) {
    %c0_i32 = arith.constant 0 : i32
    %c0_i32_0 = arith.constant 0 : i32
    %c0_i32_1 = arith.constant 0 : i32
    return %c0_i32, %c0_i32_0 : i32, i32
  }
  func.func @transform_11(%arg0: i32) -> (i32, i32) {
    %c0_i32 = arith.constant 0 : i32
    %c0_i32_0 = arith.constant 0 : i32
    %c0_i32_1 = arith.constant 0 : i32
    return %c0_i32, %c0_i32_0 : i32, i32
  }
  func.func @transform_12(%arg0: i32) -> (i32, i32) {
    %c0_i32 = arith.constant 0 : i32
    %c0_i32_0 = arith.constant 0 : i32
    %c0_i32_1 = arith.constant 0 : i32
    return %c0_i32, %c0_i32_0 : i32, i32
  }
  func.func @transform_13(%arg0: i32) -> (i32, i32) {
    %c0_i32 = arith.constant 0 : i32
    %c0_i32_0 = arith.constant 0 : i32
    %c0_i32_1 = arith.constant 0 : i32
    return %c0_i32, %c0_i32_0 : i32, i32
  }
  func.func @transform_14(%arg0: i32) -> (i32, i32) {
    %c0_i32 = arith.constant 0 : i32
    %c0_i32_0 = arith.constant 0 : i32
    return %arg0, %c0_i32 : i32, i32
  }
}

</mosaic_0001>

<llo_original>
// kernel: tpu_custom_call.1
$region0: #{tpu_custom_call.1}
  #allocation0 [shape = 'u32[]', space=smem, size = 0x4, offset = 0x4, fixed_abs, tag = 'smem constant byte address 0x4 - core index']
  #allocation1 [shape = 'u32[144,128]{1,0:T(1,128)}', space=vmem, size = 0x12000, scoped, tag = 'internal scratch']
  #allocation2 [shape = 'f32[8,8,8]{2,1,0:T(8,128)}', space=vmem, size = 0x8000, scoped, tag = 'scratch operand']
  #allocation3 [shape = 'f32[8,8,8]{2,1,0:T(8,128)}', space=vmem, size = 0x8000, scoped, tag = 'scratch operand']
  #allocation4 [shape = 'f32[8,8,8]{2,1,0:T(8,128)}', space=vmem, size = 0x8000, scoped, tag = 'scratch operand']
  #allocation5 [shape = 'f32[16,32]{1,0:T(8,128)}', space=vmem, size = 0x2000, scoped, tag = 'scratch operand']
  %s0 = inlined_call_operand.vmem [shape: f32[16,32], index: 0, kind: input, shape index: {}]
  %s1 = inlined_call_operand.vmem [shape: f32[16,32], index: 1, kind: input, shape index: {}]
  %s2 = inlined_call_operand.vmem [shape: f32[1,32], index: 2, kind: input, shape index: {}]
  %s3 = inlined_call_operand.vmem [shape: f32[1,32], index: 3, kind: input, shape index: {}]
  %s4 = inlined_call_operand.vmem [shape: f32[1,32], index: 4, kind: input, shape index: {}]
  %s5 = inlined_call_operand.vmem [shape: f32[1,32], index: 5, kind: input, shape index: {}]
  %s6 = inlined_call_operand.vmem [shape: f32[32,96], index: 6, kind: input, shape index: {}]
  %s7 = inlined_call_operand.vmem [shape: f32[1,96], index: 7, kind: input, shape index: {}]
  %s8 = inlined_call_operand.vmem [shape: f32[32,32], index: 8, kind: input, shape index: {}]
  %s9 = inlined_call_operand.vmem [shape: f32[1,32], index: 9, kind: input, shape index: {}]
  %s10 = inlined_call_operand.vmem [shape: f32[32,128], index: 10, kind: input, shape index: {}]
  %s11 = inlined_call_operand.vmem [shape: f32[1,128], index: 11, kind: input, shape index: {}]
  %s12 = inlined_call_operand.vmem [shape: f32[128,32], index: 12, kind: input, shape index: {}]
  %s13 = inlined_call_operand.vmem [shape: f32[1,32], index: 13, kind: input, shape index: {}]
  %s14 = inlined_call_operand.hbm [shape: f32[16,32], index: 14, kind: output, shape index: {}]
  %s15 = sld [smem:[#allocation0]]
  $region66: #{tpu_custom_call.1} parent=0
    _
  %s17 = ssub.s32 1, %s15
  %s18 = scalar_select 0, %s17, %s15
  $region1: #{tpu_custom_call.1} parent=0
    #allocation6 [shape = 'u8[8192]{0}', space=vmem, size = 0x2000, scoped, tag = 'output window, operand 0, single buffered']
    #allocation7 [shape = 's32[1]{0}', space=sflag, size = 0x4, scoped, tag = 'scoped memory for tpu_custom_call.1']
    %19 = vsyncpa [#allocation7], 0
    // Predicated region
    $region2: #{tpu_custom_call.1} parent=1 // pred_check
      _
    $region3: #{tpu_custom_call.1} parent=1 // pred_check_branch
      %21 = sbr.rel (0) target = $region5
    $region4: #{tpu_custom_call.1} parent=1 // pred_region
      _
    $region5: #{tpu_custom_call.1} parent=1 // pred_fallthru
      _
    // Predicated region
    $region6: #{tpu_custom_call.1} parent=1 // pred_check
      _
    $region7: #{tpu_custom_call.1} parent=1 // pred_check_branch
      %23 = sbr.rel (0) target = $region9
    $region8: #{tpu_custom_call.1} parent=1 // pred_region
      _
    $region9: #{tpu_custom_call.1} parent=1 // pred_fallthru
      _
    // Predicated region
    $region10: #{tpu_custom_call.1} parent=1 // pred_check
      _
    $region11: #{tpu_custom_call.1} parent=1 // pred_check_branch
      %25 = sbr.rel (0) target = $region13
    $region12: #{tpu_custom_call.1} parent=1 // pred_region
      _
    $region13: #{tpu_custom_call.1} parent=1 // pred_fallthru
      _
    // Predicated region
    $region14: #{tpu_custom_call.1} parent=1 // pred_check
      _
    $region15: #{tpu_custom_call.1} parent=1 // pred_check_branch
      %27 = sbr.rel (0) target = $region17
    $region16: #{tpu_custom_call.1} parent=1 // pred_region
      _
    $region17: #{tpu_custom_call.1} parent=1 // pred_fallthru
      _
    // Predicated region
    $region18: #{tpu_custom_call.1} parent=1 // pred_check
      _
    $region19: #{tpu_custom_call.1} parent=1 // pred_check_branch
      %29 = sbr.rel (0) target = $region21
    $region20: #{tpu_custom_call.1} parent=1 // pred_region
      _
    $region21: #{tpu_custom_call.1} parent=1 // pred_fallthru
      _
    // Predicated region
    $region22: #{tpu_custom_call.1} parent=1 // pred_check
      _
    $region23: #{tpu_custom_call.1} parent=1 // pred_check_branch
      %31 = sbr.rel (0) target = $region25
    $region24: #{tpu_custom_call.1} parent=1 // pred_region
      _
    $region25: #{tpu_custom_call.1} parent=1 // pred_fallthru
      _
    // Predicated region
    $region26: #{tpu_custom_call.1} parent=1 // pred_check
      _
    $region27: #{tpu_custom_call.1} parent=1 // pred_check_branch
      %33 = sbr.rel (0) target = $region29
    $region28: #{tpu_custom_call.1} parent=1 // pred_region
      _
    $region29: #{tpu_custom_call.1} parent=1 // pred_fallthru
      _
    // Predicated region
    $region30: #{tpu_custom_call.1} parent=1 // pred_check
      _
    $region31: #{tpu_custom_call.1} parent=1 // pred_check_branch
      %35 = sbr.rel (0) target = $region33
    $region32: #{tpu_custom_call.1} parent=1 // pred_region
      _
    $region33: #{tpu_custom_call.1} parent=1 // pred_fallthru
      _
    // Predicated region
    $region34: #{tpu_custom_call.1} parent=1 // pred_check
      _
    $region35: #{tpu_custom_call.1} parent=1 // pred_check_branch
      %37 = sbr.rel (0) target = $region37
    $region36: #{tpu_custom_call.1} parent=1 // pred_region
      _
    $region37: #{tpu_custom_call.1} parent=1 // pred_fallthru
      _
    // Predicated region
    $region38: #{tpu_custom_call.1} parent=1 // pred_check
      _
    $region39: #{tpu_custom_call.1} parent=1 // pred_check_branch
      %39 = sbr.rel (0) target = $region41
    $region40: #{tpu_custom_call.1} parent=1 // pred_region
      _
    $region41: #{tpu_custom_call.1} parent=1 // pred_fallthru
      _
    // Predicated region
    $region42: #{tpu_custom_call.1} parent=1 // pred_check
      _
    $region43: #{tpu_custom_call.1} parent=1 // pred_check_branch
      %41 = sbr.rel (0) target = $region45
    $region44: #{tpu_custom_call.1} parent=1 // pred_region
      _
    $region45: #{tpu_custom_call.1} parent=1 // pred_fallthru
      _
    // Predicated region
    $region46: #{tpu_custom_call.1} parent=1 // pred_check
      _
    $region47: #{tpu_custom_call.1} parent=1 // pred_check_branch
      %43 = sbr.rel (0) target = $region49
    $region48: #{tpu_custom_call.1} parent=1 // pred_region
      _
    $region49: #{tpu_custom_call.1} parent=1 // pred_fallthru
      _
    // Predicated region
    $region50: #{tpu_custom_call.1} parent=1 // pred_check
      _
    $region51: #{tpu_custom_call.1} parent=1 // pred_check_branch
      %45 = sbr.rel (0) target = $region53
    $region52: #{tpu_custom_call.1} parent=1 // pred_region
      _
    $region53: #{tpu_custom_call.1} parent=1 // pred_fallthru
      _
    // Predicated region
    $region54: #{tpu_custom_call.1} parent=1 // pred_check
      _
    $region55: #{tpu_custom_call.1} parent=1 // pred_check_branch
      %47 = sbr.rel (0) target = $region57
    $region56: #{tpu_custom_call.1} parent=1 // pred_region
      _
    $region57: #{tpu_custom_call.1} parent=1 // pred_fallthru
      _
    %v48 = vld [vmem:[%s0] sm:$0xff]
    %v49 = vld [vmem:[%s0 + $0x8] sm:$0xff]
    %v50 = vld [vmem:[%s1] sm:$0xff]
    %v51 = vld [vmem:[%s1 + $0x8] sm:$0xff]
    %v52 = vld [vmem:[%s2] sm:$0x1]
    %v53 = vld [vmem:[%s3] sm:$0x1]
    %vm54 = vcmask 261120
    %v55 = vsel %vm54, %v48, 0.0
    %56 = vadd.xlane.f32.xlu0 %v55
    %v57 = vpop.xlane.xlu0 %56
    %v58 = vsel %vm54, %v49, 0.0
    %59 = vadd.xlane.f32.xlu0 %v58
    %v60 = vpop.xlane.xlu0 %59
    %v61 = vrcp.pop 32.0
    %v62 = vmul.f32 %v57, %v61
    %v63 = vmul.f32 %v60, %v61
    %v64 = vsub.f32 %v48, %v62
    %v65 = vsub.f32 %v49, %v63
    %v66 = vmul.f32 %v64, %v64
    %v67 = vmul.f32 %v65, %v65
    %v68 = vsel %vm54, %v66, 0.0
    %69 = vadd.xlane.f32.xlu0 %v68
    %v70 = vpop.xlane.xlu0 %69
    %v71 = vsel %vm54, %v67, 0.0
    %72 = vadd.xlane.f32.xlu0 %v71
    %v73 = vpop.xlane.xlu0 %72
    %v74 = vmul.f32 %v70, %v61
    %v75 = vmul.f32 %v73, %v61
    %v76 = vadd.f32 %v74, 1e-05
    %v77 = vadd.f32 %v75, 1e-05
    %v78 = vrsqrt.pop %v76
    %v79 = vrsqrt.pop %v77
    %v80 = vmul.f32 %v64, %v78
    %v81 = vmul.f32 %v65, %v79
    %v83 = vlaneseq
    %v84 = vshrl.u32 %v83, 7
    %v85 = vsub.s32 0, %v84
    %v86 = vrot.slane %v52, %v85
    %v88 = vmul.f32 %v80, %v86
    %v89 = vmul.f32 %v81, %v86
    %v91 = vlaneseq
    %v92 = vshrl.u32 %v91, 7
    %v93 = vsub.s32 0, %v92
    %v94 = vrot.slane %v53, %v93
    %v96 = vadd.f32 %v88, %v94
    %v97 = vadd.f32 %v89, %v94
    %v98 = vadd.f32 %v96, %v50
    %v99 = vadd.f32 %v97, %v51
    %v100 = vld [vmem:[%s6] sm:$0xff]
    %v101 = vld [vmem:[%s6 + $0x8] sm:$0xff]
    %v102 = vld [vmem:[%s6 + $0x10] sm:$0xff]
    %v103 = vld [vmem:[%s6 + $0x18] sm:$0xff]
    %v104 = vld [vmem:[%s7] sm:$0x1]
    %v106 = vlaneseq
    %v107 = vshrl.u32 %v106, 7
    %v108 = vsub.s32 0, %v107
    %v109 = vrot.slane %v104, %v108
    %v112 = vsel %vm54, %v98, 0
    %v115 = vsel %vm54, %v99, 0
    %117 = vmatprep.subr.mxu0 0.0
    %118 = vmatpush1.msra.mxu0 0.0
    %119 = vmatprep.subr.mxu0 0.0
    %120 = vmatpush1.msra.mxu0 0.0
    %121 = vmatprep.subr.mxu0 0.0
    %122 = vmatpush1.msra.mxu0 0.0
    %123 = vmatprep.subr.mxu0 0.0
    %124 = vmatpush1.msra.mxu0 0.0
    %125 = vmatprep.subr.mxu0 0.0
    %126 = vmatpush1.msra.mxu0 0.0
    %127 = vmatprep.subr.mxu0 0.0
    %128 = vmatpush1.msra.mxu0 0.0
    %129 = vmatprep.subr.mxu0 0.0
    %130 = vmatpush1.msra.mxu0 0.0
    %131 = vmatprep.subr.mxu0 0.0
    %132 = vmatpush1.msra.mxu0 0.0
    %133 = vmatprep.subr.mxu0 0.0
    %134 = vmatpush1.msra.mxu0 0.0
    %135 = vmatprep.subr.mxu0 0.0
    %136 = vmatpush1.msra.mxu0 0.0
    %137 = vmatprep.subr.mxu0 0.0
    %138 = vmatpush1.msra.mxu0 0.0
    %139 = vmatprep.subr.mxu0 0.0
    %140 = vmatpush1.msra.mxu0 0.0
    %141 = vmatprep.subr.mxu0 0.0
    %142 = vmatpush1.msra.mxu0 %v103
    %143 = vmatprep.subr.mxu0 0.0
    %144 = vmatpush1.msra.mxu0 %v102
    %145 = vmatprep.subr.mxu0 0.0
    %146 = vmatpush1.msra.mxu0 %v101
    %147 = vmatprep.subr.mxu0 0.0
    %148 = vmatpush1.msra.mxu0 %v100
    %149 = vmatprep.subr.mxu0 0.0
    %150 = vmatpush2.msra.mxu0 0.0
    %151 = vmatprep.subr.mxu0 0.0
    %152 = vmatpush2.msra.mxu0 0.0
    %153 = vmatprep.subr.mxu0 0.0
    %154 = vmatpush2.msra.mxu0 0.0
    %155 = vmatprep.subr.mxu0 0.0
    %156 = vmatpush2.msra.mxu0 0.0
    %157 = vmatprep.subr.mxu0 0.0
    %158 = vmatpush2.msra.mxu0 0.0
    %159 = vmatprep.subr.mxu0 0.0
    %160 = vmatpush2.msra.mxu0 0.0
    %161 = vmatprep.subr.mxu0 0.0
    %162 = vmatpush2.msra.mxu0 0.0
    %163 = vmatprep.subr.mxu0 0.0
    %164 = vmatpush2.msra.mxu0 0.0
    %165 = vmatprep.subr.mxu0 0.0
    %166 = vmatpush2.msra.mxu0 0.0
    %167 = vmatprep.subr.mxu0 0.0
    %168 = vmatpush2.msra.mxu0 0.0
    %169 = vmatprep.subr.mxu0 0.0
    %170 = vmatpush2.msra.mxu0 0.0
    %171 = vmatprep.subr.mxu0 0.0
    %172 = vmatpush2.msra.mxu0 0.0
    %173 = vmatprep.subr.mxu0 0.0
    %174 = vmatpush2.msra.mxu0 0.0
    %175 = vmatprep.subr.mxu0 0.0
    %176 = vmatpush2.msra.mxu0 0.0
    %177 = vmatprep.subr.mxu0 0.0
    %178 = vmatpush2.msra.mxu0 0.0
    %179 = vmatprep.subr.mxu0 0.0
    %180 = vmatpush2.msra.mxu0 0.0
    %181 = vmatprep.mubr.f32.mxu0 0.0
    %182 = vmatmul.mubr.f32.gmra.mxu0 %v112
    %v183 = vpop.f32.mrf.mxu0
    %v184 = vadd.f32 %v109, %v183
    %v185 = vpop.f32.mrf.mxu0
    %186 = vmatprep.mubr.f32.mxu0 0.0
    %187 = vmatmul.mubr.f32.gmra.mxu0 %v115
    %v188 = vpop.f32.mrf.mxu0
    %v189 = vadd.f32 %v109, %v188
    %v190 = vpop.f32.mrf.mxu0
    %191 = vdwg.mxu0
    %196 = vrot.lane.b32.xlu0 %v100, 64
    %v197 = vpop.permute.xlu0 %196
    %198 = vrot.lane.b32.xlu0 %v101, 64
    %v199 = vpop.permute.xlu0 %198
    %200 = vrot.lane.b32.xlu0 %v102, 64
    %v201 = vpop.permute.xlu0 %200
    %202 = vrot.lane.b32.xlu0 %v103, 64
    %v203 = vpop.permute.xlu0 %202
    %208 = vrot.lane.b32.xlu0 %v109, 64
    %v209 = vpop.permute.xlu0 %208
    %v212 = vsel %vm54, %v96, 0
    %v215 = vsel %vm54, %v97, 0
    %217 = vmatprep.subr.mxu0 0.0
    %218 = vmatpush1.msra.mxu0 0.0
    %219 = vmatprep.subr.mxu0 0.0
    %220 = vmatpush1.msra.mxu0 0.0
    %221 = vmatprep.subr.mxu0 0.0
    %222 = vmatpush1.msra.mxu0 0.0
    %223 = vmatprep.subr.mxu0 0.0
    %224 = vmatpush1.msra.mxu0 0.0
    %225 = vmatprep.subr.mxu0 0.0
    %226 = vmatpush1.msra.mxu0 0.0
    %227 = vmatprep.subr.mxu0 0.0
    %228 = vmatpush1.msra.mxu0 0.0
    %229 = vmatprep.subr.mxu0 0.0
    %230 = vmatpush1.msra.mxu0 0.0
    %231 = vmatprep.subr.mxu0 0.0
    %232 = vmatpush1.msra.mxu0 0.0
    %233 = vmatprep.subr.mxu0 0.0
    %234 = vmatpush1.msra.mxu0 0.0
    %235 = vmatprep.subr.mxu0 0.0
    %236 = vmatpush1.msra.mxu0 0.0
    %237 = vmatprep.subr.mxu0 0.0
    %238 = vmatpush1.msra.mxu0 0.0
    %239 = vmatprep.subr.mxu0 0.0
    %240 = vmatpush1.msra.mxu0 0.0
    %241 = vmatprep.subr.mxu0 0.0
    %242 = vmatpush1.msra.mxu0 %v203
    %243 = vmatprep.subr.mxu0 0.0
    %244 = vmatpush1.msra.mxu0 %v201
    %245 = vmatprep.subr.mxu0 0.0
    %246 = vmatpush1.msra.mxu0 %v199
    %247 = vmatprep.subr.mxu0 0.0
    %248 = vmatpush1.msra.mxu0 %v197
    %249 = vmatprep.subr.mxu0 0.0
    %250 = vmatpush2.msra.mxu0 0.0
    %251 = vmatprep.subr.mxu0 0.0
    %252 = vmatpush2.msra.mxu0 0.0
    %253 = vmatprep.subr.mxu0 0.0
    %254 = vmatpush2.msra.mxu0 0.0
    %255 = vmatprep.subr.mxu0 0.0
    %256 = vmatpush2.msra.mxu0 0.0
    %257 = vmatprep.subr.mxu0 0.0
    %258 = vmatpush2.msra.mxu0 0.0
    %259 = vmatprep.subr.mxu0 0.0
    %260 = vmatpush2.msra.mxu0 0.0
    %261 = vmatprep.subr.mxu0 0.0
    %262 = vmatpush2.msra.mxu0 0.0
    %263 = vmatprep.subr.mxu0 0.0
    %264 = vmatpush2.msra.mxu0 0.0
    %265 = vmatprep.subr.mxu0 0.0
    %266 = vmatpush2.msra.mxu0 0.0
    %267 = vmatprep.subr.mxu0 0.0
    %268 = vmatpush2.msra.mxu0 0.0
    %269 = vmatprep.subr.mxu0 0.0
    %270 = vmatpush2.msra.mxu0 0.0
    %271 = vmatprep.subr.mxu0 0.0
    %272 = vmatpush2.msra.mxu0 0.0
    %273 = vmatprep.subr.mxu0 0.0
    %274 = vmatpush2.msra.mxu0 0.0
    %275 = vmatprep.subr.mxu0 0.0
    %276 = vmatpush2.msra.mxu0 0.0
    %277 = vmatprep.subr.mxu0 0.0
    %278 = vmatpush2.msra.mxu0 0.0
    %279 = vmatprep.subr.mxu0 0.0
    %280 = vmatpush2.msra.mxu0 0.0
    %281 = vmatprep.mubr.f32.mxu0 0.0
    %282 = vmatmul.mubr.f32.gmra.mxu0 %v212
    %v283 = vpop.f32.mrf.mxu0
    %v284 = vadd.f32 %v209, %v283
    %v285 = vpop.f32.mrf.mxu0
    %286 = vmatprep.mubr.f32.mxu0 0.0
    %287 = vmatmul.mubr.f32.gmra.mxu0 %v215
    %v288 = vpop.f32.mrf.mxu0
    %v289 = vadd.f32 %v209, %v288
    %v290 = vpop.f32.mrf.mxu0
    %291 = vdwg.mxu0
    %vm292 = vcmask 64512
    %293 = vst.msk [vmem:[#allocation2] sm:$0xff] %vm292, %v184
    %295 = vrot.lane.b32.xlu0 %v184, 96
    %v296 = vpop.permute.xlu0 %295
    %298 = vst.msk [vmem:[#allocation3] sm:$0xff] %vm292, %v296
    %299 = vst.msk [vmem:[#allocation4] sm:$0xff] %vm292, %v284
    %300 = vrot.lane.b32.xlu0 %v184, 120
    %v301 = vpop.permute.xlu0 %300
    %s303 = scalar_lea.vmem [#allocation2], 8
    %304 = vst.msk [vmem:[%s303] sm:$0xff] %vm292, %v301
    %305 = vrot.lane.b32.xlu0 %v184, 88
    %v306 = vpop.permute.xlu0 %305
    %s308 = scalar_lea.vmem [#allocation3], 8
    %309 = vst.msk [vmem:[%s308] sm:$0xff] %vm292, %v306
    %311 = vrot.lane.b32.xlu0 %v284, 120
    %v312 = vpop.permute.xlu0 %311
    %s314 = scalar_lea.vmem [#allocation4], 8
    %315 = vst.msk [vmem:[%s314] sm:$0xff] %vm292, %v312
    %316 = vrot.lane.b32.xlu0 %v184, 112
    %v317 = vpop.permute.xlu0 %316
    %s319 = scalar_lea.vmem [#allocation2], 16
    %320 = vst.msk [vmem:[%s319] sm:$0xff] %vm292, %v317
    %321 = vrot.lane.b32.xlu0 %v184, 80
    %v322 = vpop.permute.xlu0 %321
    %s324 = scalar_lea.vmem [#allocation3], 16
    %325 = vst.msk [vmem:[%s324] sm:$0xff] %vm292, %v322
    %326 = vrot.lane.b32.xlu0 %v284, 112
    %v327 = vpop.permute.xlu0 %326
    %s329 = scalar_lea.vmem [#allocation4], 16
    %330 = vst.msk [vmem:[%s329] sm:$0xff] %vm292, %v327
    %331 = vrot.lane.b32.xlu0 %v184, 104
    %v332 = vpop.permute.xlu0 %331
    %s334 = scalar_lea.vmem [#allocation2], 24
    %335 = vst.msk [vmem:[%s334] sm:$0xff] %vm292, %v332
    %336 = vrot.lane.b32.xlu0 %v184, 72
    %v337 = vpop.permute.xlu0 %336
    %s339 = scalar_lea.vmem [#allocation3], 24
    %340 = vst.msk [vmem:[%s339] sm:$0xff] %vm292, %v337
    %341 = vrot.lane.b32.xlu0 %v284, 104
    %v342 = vpop.permute.xlu0 %341
    %s344 = scalar_lea.vmem [#allocation4], 24
    %345 = vst.msk [vmem:[%s344] sm:$0xff] %vm292, %v342
    %s346 = scalar_lea.vmem [#allocation2], 32
    %347 = vst.msk [vmem:[%s346] sm:$0xff] %vm292, %v189
    %349 = vrot.lane.b32.xlu0 %v189, 96
    %v350 = vpop.permute.xlu0 %349
    %s352 = scalar_lea.vmem [#allocation3], 32
    %353 = vst.msk [vmem:[%s352] sm:$0xff] %vm292, %v350
    %s354 = scalar_lea.vmem [#allocation4], 32
    %355 = vst.msk [vmem:[%s354] sm:$0xff] %vm292, %v289
    %356 = vrot.lane.b32.xlu0 %v189, 120
    %v357 = vpop.permute.xlu0 %356
    %s359 = scalar_lea.vmem [#allocation2], 40
    %360 = vst.msk [vmem:[%s359] sm:$0xff] %vm292, %v357
    %361 = vrot.lane.b32.xlu0 %v189, 88
    %v362 = vpop.permute.xlu0 %361
    %s364 = scalar_lea.vmem [#allocation3], 40
    %365 = vst.msk [vmem:[%s364] sm:$0xff] %vm292, %v362
    %367 = vrot.lane.b32.xlu0 %v289, 120
    %v368 = vpop.permute.xlu0 %367
    %s370 = scalar_lea.vmem [#allocation4], 40
    %371 = vst.msk [vmem:[%s370] sm:$0xff] %vm292, %v368
    %372 = vrot.lane.b32.xlu0 %v189, 112
    %v373 = vpop.permute.xlu0 %372
    %s375 = scalar_lea.vmem [#allocation2], 48
    %376 = vst.msk [vmem:[%s375] sm:$0xff] %vm292, %v373
    %377 = vrot.lane.b32.xlu0 %v189, 80
    %v378 = vpop.permute.xlu0 %377
    %s380 = scalar_lea.vmem [#allocation3], 48
    %381 = vst.msk [vmem:[%s380] sm:$0xff] %vm292, %v378
    %382 = vrot.lane.b32.xlu0 %v289, 112
    %v383 = vpop.permute.xlu0 %382
    %s385 = scalar_lea.vmem [#allocation4], 48
    %386 = vst.msk [vmem:[%s385] sm:$0xff] %vm292, %v383
    %387 = vrot.lane.b32.xlu0 %v189, 104
    %v388 = vpop.permute.xlu0 %387
    %s390 = scalar_lea.vmem [#allocation2], 56
    %391 = vst.msk [vmem:[%s390] sm:$0xff] %vm292, %v388
    %392 = vrot.lane.b32.xlu0 %v189, 72
    %v393 = vpop.permute.xlu0 %392
    %s395 = scalar_lea.vmem [#allocation3], 56
    %396 = vst.msk [vmem:[%s395] sm:$0xff] %vm292, %v393
    %397 = vrot.lane.b32.xlu0 %v289, 104
    %v398 = vpop.permute.xlu0 %397
    %s400 = scalar_lea.vmem [#allocation4], 56
    %401 = vst.msk [vmem:[%s400] sm:$0xff] %vm292, %v398
    %v402 = vld [vmem:[#allocation2] sm:$0xff]
    %v403 = vld [vmem:[#allocation2 + $0x8] sm:$0xff]
    %v404 = vld [vmem:[#allocation2 + $0x10] sm:$0xff]
    %v405 = vld [vmem:[#allocation2 + $0x18] sm:$0xff]
    %v406 = vld [vmem:[#allocation2 + $0x20] sm:$0xff]
    %v407 = vld [vmem:[#allocation2 + $0x28] sm:$0xff]
    %v408 = vld [vmem:[#allocation2 + $0x30] sm:$0xff]
    %v409 = vld [vmem:[#allocation2 + $0x38] sm:$0xff]
    %v410 = vld [vmem:[#allocation3] sm:$0xff]
    %v411 = vld [vmem:[#allocation3 + $0x8] sm:$0xff]
    %v412 = vld [vmem:[#allocation3 + $0x10] sm:$0xff]
    %v413 = vld [vmem:[#allocation3 + $0x18] sm:$0xff]
    %v414 = vld [vmem:[#allocation3 + $0x20] sm:$0xff]
    %v415 = vld [vmem:[#allocation3 + $0x28] sm:$0xff]
    %v416 = vld [vmem:[#allocation3 + $0x30] sm:$0xff]
    %v417 = vld [vmem:[#allocation3 + $0x38] sm:$0xff]
    %v418 = vld [vmem:[#allocation4] sm:$0xff]
    %v419 = vld [vmem:[#allocation4 + $0x8] sm:$0xff]
    %v420 = vld [vmem:[#allocation4 + $0x10] sm:$0xff]
    %v421 = vld [vmem:[#allocation4 + $0x18] sm:$0xff]
    %v422 = vld [vmem:[#allocation4 + $0x20] sm:$0xff]
    %v423 = vld [vmem:[#allocation4 + $0x28] sm:$0xff]
    %v424 = vld [vmem:[#allocation4 + $0x30] sm:$0xff]
    %v425 = vld [vmem:[#allocation4 + $0x38] sm:$0xff]
    %v427 = vsel %vm292, %v402, 0
    %v430 = vsel %vm292, %v410, 0
    %432 = vmatprep.subr.mxu0 0.0
    %433 = vmatpush1.xpose.msra.mxu0 0.0
    %434 = vmatprep.subr.mxu0 0.0
    %435 = vmatpush1.xpose.msra.mxu0 0.0
    %436 = vmatprep.subr.mxu0 0.0
    %437 = vmatpush1.xpose.msra.mxu0 0.0
    %438 = vmatprep.subr.mxu0 0.0
    %439 = vmatpush1.xpose.msra.mxu0 0.0
    %440 = vmatprep.subr.mxu0 0.0
    %441 = vmatpush1.xpose.msra.mxu0 0.0
    %442 = vmatprep.subr.mxu0 0.0
    %443 = vmatpush1.xpose.msra.mxu0 0.0
    %444 = vmatprep.subr.mxu0 0.0
    %445 = vmatpush1.xpose.msra.mxu0 0.0
    %446 = vmatprep.subr.mxu0 0.0
    %447 = vmatpush1.xpose.msra.mxu0 0.0
    %448 = vmatprep.subr.mxu0 0.0
    %449 = vmatpush1.xpose.msra.mxu0 0.0
    %450 = vmatprep.subr.mxu0 0.0
    %451 = vmatpush1.xpose.msra.mxu0 0.0
    %452 = vmatprep.subr.mxu0 0.0
    %453 = vmatpush1.xpose.msra.mxu0 0.0
    %454 = vmatprep.subr.mxu0 0.0
    %455 = vmatpush1.xpose.msra.mxu0 0.0
    %456 = vmatprep.subr.mxu0 0.0
    %457 = vmatpush1.xpose.msra.mxu0 0.0
    %458 = vmatprep.subr.mxu0 0.0
    %459 = vmatpush1.xpose.msra.mxu0 0.0
    %460 = vmatprep.subr.mxu0 0.0
    %461 = vmatpush1.xpose.msra.mxu0 0.0
    %462 = vmatprep.subr.mxu0 0.0
    %463 = vmatpush1.xpose.msra.mxu0 %v430
    %464 = vmatprep.subr.mxu0 0.0
    %465 = vmatpush2.xpose.msra.mxu0 0.0
    %466 = vmatprep.subr.mxu0 0.0
    %467 = vmatpush2.xpose.msra.mxu0 0.0
    %468 = vmatprep.subr.mxu0 0.0
    %469 = vmatpush2.xpose.msra.mxu0 0.0
    %470 = vmatprep.subr.mxu0 0.0
    %471 = vmatpush2.xpose.msra.mxu0 0.0
    %472 = vmatprep.subr.mxu0 0.0
    %473 = vmatpush2.xpose.msra.mxu0 0.0
    %474 = vmatprep.subr.mxu0 0.0
    %475 = vmatpush2.xpose.msra.mxu0 0.0
    %476 = vmatprep.subr.mxu0 0.0
    %477 = vmatpush2.xpose.msra.mxu0 0.0
    %478 = vmatprep.subr.mxu0 0.0
    %479 = vmatpush2.xpose.msra.mxu0 0.0
    %480 = vmatprep.subr.mxu0 0.0
    %481 = vmatpush2.xpose.msra.mxu0 0.0
    %482 = vmatprep.subr.mxu0 0.0
    %483 = vmatpush2.xpose.msra.mxu0 0.0
    %484 = vmatprep.subr.mxu0 0.0
    %485 = vmatpush2.xpose.msra.mxu0 0.0
    %486 = vmatprep.subr.mxu0 0.0
    %487 = vmatpush2.xpose.msra.mxu0 0.0
    %488 = vmatprep.subr.mxu0 0.0
    %489 = vmatpush2.xpose.msra.mxu0 0.0
    %490 = vmatprep.subr.mxu0 0.0
    %491 = vmatpush2.xpose.msra.mxu0 0.0
    %492 = vmatprep.subr.mxu0 0.0
    %493 = vmatpush2.xpose.msra.mxu0 0.0
    %494 = vmatprep.subr.mxu0 0.0
    %495 = vmatpush2.xpose.msra.mxu0 0.0
    %496 = vmatprep.mubr.f32.mxu0 0.0
    %497 = vmatmul.mubr.f32.gmra.mxu0 %v427
    %v498 = vpop.f32.mrf.mxu0
    %v499 = vadd.f32 0.0, %v498
    %v500 = vpop.f32.mrf.mxu0
    %501 = vdwg.mxu0
    %v503 = vsel %vm292, %v403, 0
    %v506 = vsel %vm292, %v411, 0
    %508 = vmatprep.subr.mxu0 0.0
    %509 = vmatpush1.xpose.msra.mxu0 0.0
    %510 = vmatprep.subr.mxu0 0.0
    %511 = vmatpush1.xpose.msra.mxu0 0.0
    %512 = vmatprep.subr.mxu0 0.0
    %513 = vmatpush1.xpose.msra.mxu0 0.0
    %514 = vmatprep.subr.mxu0 0.0
    %515 = vmatpush1.xpose.msra.mxu0 0.0
    %516 = vmatprep.subr.mxu0 0.0
    %517 = vmatpush1.xpose.msra.mxu0 0.0
    %518 = vmatprep.subr.mxu0 0.0
    %519 = vmatpush1.xpose.msra.mxu0 0.0
    %520 = vmatprep.subr.mxu0 0.0
    %521 = vmatpush1.xpose.msra.mxu0 0.0
    %522 = vmatprep.subr.mxu0 0.0
    %523 = vmatpush1.xpose.msra.mxu0 0.0
    %524 = vmatprep.subr.mxu0 0.0
    %525 = vmatpush1.xpose.msra.mxu0 0.0
    %526 = vmatprep.subr.mxu0 0.0
    %527 = vmatpush1.xpose.msra.mxu0 0.0
    %528 = vmatprep.subr.mxu0 0.0
    %529 = vmatpush1.xpose.msra.mxu0 0.0
    %530 = vmatprep.subr.mxu0 0.0
    %531 = vmatpush1.xpose.msra.mxu0 0.0
    %532 = vmatprep.subr.mxu0 0.0
    %533 = vmatpush1.xpose.msra.mxu0 0.0
    %534 = vmatprep.subr.mxu0 0.0
    %535 = vmatpush1.xpose.msra.mxu0 0.0
    %536 = vmatprep.subr.mxu0 0.0
    %537 = vmatpush1.xpose.msra.mxu0 0.0
    %538 = vmatprep.subr.mxu0 0.0
    %539 = vmatpush1.xpose.msra.mxu0 %v506
    %540 = vmatprep.subr.mxu0 0.0
    %541 = vmatpush2.xpose.msra.mxu0 0.0
    %542 = vmatprep.subr.mxu0 0.0
    %543 = vmatpush2.xpose.msra.mxu0 0.0
    %544 = vmatprep.subr.mxu0 0.0
    %545 = vmatpush2.xpose.msra.mxu0 0.0
    %546 = vmatprep.subr.mxu0 0.0
    %547 = vmatpush2.xpose.msra.mxu0 0.0
    %548 = vmatprep.subr.mxu0 0.0
    %549 = vmatpush2.xpose.msra.mxu0 0.0
    %550 = vmatprep.subr.mxu0 0.0
    %551 = vmatpush2.xpose.msra.mxu0 0.0
    %552 = vmatprep.subr.mxu0 0.0
    %553 = vmatpush2.xpose.msra.mxu0 0.0
    %554 = vmatprep.subr.mxu0 0.0
    %555 = vmatpush2.xpose.msra.mxu0 0.0
    %556 = vmatprep.subr.mxu0 0.0
    %557 = vmatpush2.xpose.msra.mxu0 0.0
    %558 = vmatprep.subr.mxu0 0.0
    %559 = vmatpush2.xpose.msra.mxu0 0.0
    %560 = vmatprep.subr.mxu0 0.0
    %561 = vmatpush2.xpose.msra.mxu0 0.0
    %562 = vmatprep.subr.mxu0 0.0
    %563 = vmatpush2.xpose.msra.mxu0 0.0
    %564 = vmatprep.subr.mxu0 0.0
    %565 = vmatpush2.xpose.msra.mxu0 0.0
    %566 = vmatprep.subr.mxu0 0.0
    %567 = vmatpush2.xpose.msra.mxu0 0.0
    %568 = vmatprep.subr.mxu0 0.0
    %569 = vmatpush2.xpose.msra.mxu0 0.0
    %570 = vmatprep.subr.mxu0 0.0
    %571 = vmatpush2.xpose.msra.mxu0 0.0
    %572 = vmatprep.mubr.f32.mxu0 0.0
    %573 = vmatmul.mubr.f32.gmra.mxu0 %v503
    %v574 = vpop.f32.mrf.mxu0
    %v575 = vadd.f32 0.0, %v574
    %v576 = vpop.f32.mrf.mxu0
    %577 = vdwg.mxu0
    %v579 = vsel %vm292, %v404, 0
    %v582 = vsel %vm292, %v412, 0
    %584 = vmatprep.subr.mxu0 0.0
    %585 = vmatpush1.xpose.msra.mxu0 0.0
    %586 = vmatprep.subr.mxu0 0.0
    %587 = vmatpush1.xpose.msra.mxu0 0.0
    %588 = vmatprep.subr.mxu0 0.0
    %589 = vmatpush1.xpose.msra.mxu0 0.0
    %590 = vmatprep.subr.mxu0 0.0
    %591 = vmatpush1.xpose.msra.mxu0 0.0
    %592 = vmatprep.subr.mxu0 0.0
    %593 = vmatpush1.xpose.msra.mxu0 0.0
    %594 = vmatprep.subr.mxu0 0.0
    %595 = vmatpush1.xpose.msra.mxu0 0.0
    %596 = vmatprep.subr.mxu0 0.0
    %597 = vmatpush1.xpose.msra.mxu0 0.0
    %598 = vmatprep.subr.mxu0 0.0
    %599 = vmatpush1.xpose.msra.mxu0 0.0
    %600 = vmatprep.subr.mxu0 0.0
    %601 = vmatpush1.xpose.msra.mxu0 0.0
    %602 = vmatprep.subr.mxu0 0.0
    %603 = vmatpush1.xpose.msra.mxu0 0.0
    %604 = vmatprep.subr.mxu0 0.0
    %605 = vmatpush1.xpose.msra.mxu0 0.0
    %606 = vmatprep.subr.mxu0 0.0
    %607 = vmatpush1.xpose.msra.mxu0 0.0
    %608 = vmatprep.subr.mxu0 0.0
    %609 = vmatpush1.xpose.msra.mxu0 0.0
    %610 = vmatprep.subr.mxu0 0.0
    %611 = vmatpush1.xpose.msra.mxu0 0.0
    %612 = vmatprep.subr.mxu0 0.0
    %613 = vmatpush1.xpose.msra.mxu0 0.0
    %614 = vmatprep.subr.mxu0 0.0
    %615 = vmatpush1.xpose.msra.mxu0 %v582
    %616 = vmatprep.subr.mxu0 0.0
    %617 = vmatpush2.xpose.msra.mxu0 0.0
    %618 = vmatprep.subr.mxu0 0.0
    %619 = vmatpush2.xpose.msra.mxu0 0.0
    %620 = vmatprep.subr.mxu0 0.0
    %621 = vmatpush2.xpose.msra.mxu0 0.0
    %622 = vmatprep.subr.mxu0 0.0
    %623 = vmatpush2.xpose.msra.mxu0 0.0
    %624 = vmatprep.subr.mxu0 0.0
    %625 = vmatpush2.xpose.msra.mxu0 0.0
    %626 = vmatprep.subr.mxu0 0.0
    %627 = vmatpush2.xpose.msra.mxu0 0.0
    %628 = vmatprep.subr.mxu0 0.0
    %629 = vmatpush2.xpose.msra.mxu0 0.0
    %630 = vmatprep.subr.mxu0 0.0
    %631 = vmatpush2.xpose.msra.mxu0 0.0
    %632 = vmatprep.subr.mxu0 0.0
    %633 = vmatpush2.xpose.msra.mxu0 0.0
    %634 = vmatprep.subr.mxu0 0.0
    %635 = vmatpush2.xpose.msra.mxu0 0.0
    %636 = vmatprep.subr.mxu0 0.0
    %637 = vmatpush2.xpose.msra.mxu0 0.0
    %638 = vmatprep.subr.mxu0 0.0
    %639 = vmatpush2.xpose.msra.mxu0 0.0
    %640 = vmatprep.subr.mxu0 0.0
    %641 = vmatpush2.xpose.msra.mxu0 0.0
    %642 = vmatprep.subr.mxu0 0.0
    %643 = vmatpush2.xpose.msra.mxu0 0.0
    %644 = vmatprep.subr.mxu0 0.0
    %645 = vmatpush2.xpose.msra.mxu0 0.0
    %646 = vmatprep.subr.mxu0 0.0
    %647 = vmatpush2.xpose.msra.mxu0 0.0
    %648 = vmatprep.mubr.f32.mxu0 0.0
    %649 = vmatmul.mubr.f32.gmra.mxu0 %v579
    %v650 = vpop.f32.mrf.mxu0
    %v651 = vadd.f32 0.0, %v650
    %v652 = vpop.f32.mrf.mxu0
    %653 = vdwg.mxu0
    %v655 = vsel %vm292, %v405, 0
    %v658 = vsel %vm292, %v413, 0
    %660 = vmatprep.subr.mxu0 0.0
    %661 = vmatpush1.xpose.msra.mxu0 0.0
    %662 = vmatprep.subr.mxu0 0.0
    %663 = vmatpush1.xpose.msra.mxu0 0.0
    %664 = vmatprep.subr.mxu0 0.0
    %665 = vmatpush1.xpose.msra.mxu0 0.0
    %666 = vmatprep.subr.mxu0 0.0
    %667 = vmatpush1.xpose.msra.mxu0 0.0
    %668 = vmatprep.subr.mxu0 0.0
    %669 = vmatpush1.xpose.msra.mxu0 0.0
    %670 = vmatprep.subr.mxu0 0.0
    %671 = vmatpush1.xpose.msra.mxu0 0.0
    %672 = vmatprep.subr.mxu0 0.0
    %673 = vmatpush1.xpose.msra.mxu0 0.0
    %674 = vmatprep.subr.mxu0 0.0
    %675 = vmatpush1.xpose.msra.mxu0 0.0
    %676 = vmatprep.subr.mxu0 0.0
    %677 = vmatpush1.xpose.msra.mxu0 0.0
    %678 = vmatprep.subr.mxu0 0.0
    %679 = vmatpush1.xpose.msra.mxu0 0.0
    %680 = vmatprep.subr.mxu0 0.0
    %681 = vmatpush1.xpose.msra.mxu0 0.0
    %682 = vmatprep.subr.mxu0 0.0
    %683 = vmatpush1.xpose.msra.mxu0 0.0
    %684 = vmatprep.subr.mxu0 0.0
    %685 = vmatpush1.xpose.msra.mxu0 0.0
    %686 = vmatprep.subr.mxu0 0.0
    %687 = vmatpush1.xpose.msra.mxu0 0.0
    %688 = vmatprep.subr.mxu0 0.0
    %689 = vmatpush1.xpose.msra.mxu0 0.0
    %690 = vmatprep.subr.mxu0 0.0
    %691 = vmatpush1.xpose.msra.mxu0 %v658
    %692 = vmatprep.subr.mxu0 0.0
    %693 = vmatpush2.xpose.msra.mxu0 0.0
    %694 = vmatprep.subr.mxu0 0.0
    %695 = vmatpush2.xpose.msra.mxu0 0.0
    %696 = vmatprep.subr.mxu0 0.0
    %697 = vmatpush2.xpose.msra.mxu0 0.0
    %698 = vmatprep.subr.mxu0 0.0
    %699 = vmatpush2.xpose.msra.mxu0 0.0
    %700 = vmatprep.subr.mxu0 0.0
    %701 = vmatpush2.xpose.msra.mxu0 0.0
    %702 = vmatprep.subr.mxu0 0.0
    %703 = vmatpush2.xpose.msra.mxu0 0.0
    %704 = vmatprep.subr.mxu0 0.0
    %705 = vmatpush2.xpose.msra.mxu0 0.0
    %706 = vmatprep.subr.mxu0 0.0
    %707 = vmatpush2.xpose.msra.mxu0 0.0
    %708 = vmatprep.subr.mxu0 0.0
    %709 = vmatpush2.xpose.msra.mxu0 0.0
    %710 = vmatprep.subr.mxu0 0.0
    %711 = vmatpush2.xpose.msra.mxu0 0.0
    %712 = vmatprep.subr.mxu0 0.0
    %713 = vmatpush2.xpose.msra.mxu0 0.0
    %714 = vmatprep.subr.mxu0 0.0
    %715 = vmatpush2.xpose.msra.mxu0 0.0
    %716 = vmatprep.subr.mxu0 0.0
    %717 = vmatpush2.xpose.msra.mxu0 0.0
    %718 = vmatprep.subr.mxu0 0.0
    %719 = vmatpush2.xpose.msra.mxu0 0.0
    %720 = vmatprep.subr.mxu0 0.0
    %721 = vmatpush2.xpose.msra.mxu0 0.0
    %722 = vmatprep.subr.mxu0 0.0
    %723 = vmatpush2.xpose.msra.mxu0 0.0
    %724 = vmatprep.mubr.f32.mxu0 0.0
    %725 = vmatmul.mubr.f32.gmra.mxu0 %v655
    %v726 = vpop.f32.mrf.mxu0
    %v727 = vadd.f32 0.0, %v726
    %v728 = vpop.f32.mrf.mxu0
    %729 = vdwg.mxu0
    %v731 = vsel %vm292, %v406, 0
    %v734 = vsel %vm292, %v414, 0
    %736 = vmatprep.subr.mxu0 0.0
    %737 = vmatpush1.xpose.msra.mxu0 0.0
    %738 = vmatprep.subr.mxu0 0.0
    %739 = vmatpush1.xpose.msra.mxu0 0.0
    %740 = vmatprep.subr.mxu0 0.0
    %741 = vmatpush1.xpose.msra.mxu0 0.0
    %742 = vmatprep.subr.mxu0 0.0
    %743 = vmatpush1.xpose.msra.mxu0 0.0
    %744 = vmatprep.subr.mxu0 0.0
    %745 = vmatpush1.xpose.msra.mxu0 0.0
    %746 = vmatprep.subr.mxu0 0.0
    %747 = vmatpush1.xpose.msra.mxu0 0.0
    %748 = vmatprep.subr.mxu0 0.0
    %749 = vmatpush1.xpose.msra.mxu0 0.0
    %750 = vmatprep.subr.mxu0 0.0
    %751 = vmatpush1.xpose.msra.mxu0 0.0
    %752 = vmatprep.subr.mxu0 0.0
    %753 = vmatpush1.xpose.msra.mxu0 0.0
    %754 = vmatprep.subr.mxu0 0.0
    %755 = vmatpush1.xpose.msra.mxu0 0.0
    %756 = vmatprep.subr.mxu0 0.0
    %757 = vmatpush1.xpose.msra.mxu0 0.0
    %758 = vmatprep.subr.mxu0 0.0
    %759 = vmatpush1.xpose.msra.mxu0 0.0
    %760 = vmatprep.subr.mxu0 0.0
    %761 = vmatpush1.xpose.msra.mxu0 0.0
    %762 = vmatprep.subr.mxu0 0.0
    %763 = vmatpush1.xpose.msra.mxu0 0.0
    %764 = vmatprep.subr.mxu0 0.0
    %765 = vmatpush1.xpose.msra.mxu0 0.0
    %766 = vmatprep.subr.mxu0 0.0
    %767 = vmatpush1.xpose.msra.mxu0 %v734
    %768 = vmatprep.subr.mxu0 0.0
    %769 = vmatpush2.xpose.msra.mxu0 0.0
    %770 = vmatprep.subr.mxu0 0.0
    %771 = vmatpush2.xpose.msra.mxu0 0.0
    %772 = vmatprep.subr.mxu0 0.0
    %773 = vmatpush2.xpose.msra.mxu0 0.0
    %774 = vmatprep.subr.mxu0 0.0
    %775 = vmatpush2.xpose.msra.mxu0 0.0
    %776 = vmatprep.subr.mxu0 0.0
    %777 = vmatpush2.xpose.msra.mxu0 0.0
    %778 = vmatprep.subr.mxu0 0.0
    %779 = vmatpush2.xpose.msra.mxu0 0.0
    %780 = vmatprep.subr.mxu0 0.0
    %781 = vmatpush2.xpose.msra.mxu0 0.0
    %782 = vmatprep.subr.mxu0 0.0
    %783 = vmatpush2.xpose.msra.mxu0 0.0
    %784 = vmatprep.subr.mxu0 0.0
    %785 = vmatpush2.xpose.msra.mxu0 0.0
    %786 = vmatprep.subr.mxu0 0.0
    %787 = vmatpush2.xpose.msra.mxu0 0.0
    %788 = vmatprep.subr.mxu0 0.0
    %789 = vmatpush2.xpose.msra.mxu0 0.0
    %790 = vmatprep.subr.mxu0 0.0
    %791 = vmatpush2.xpose.msra.mxu0 0.0
    %792 = vmatprep.subr.mxu0 0.0
    %793 = vmatpush2.xpose.msra.mxu0 0.0
    %794 = vmatprep.subr.mxu0 0.0
    %795 = vmatpush2.xpose.msra.mxu0 0.0
    %796 = vmatprep.subr.mxu0 0.0
    %797 = vmatpush2.xpose.msra.mxu0 0.0
    %798 = vmatprep.subr.mxu0 0.0
    %799 = vmatpush2.xpose.msra.mxu0 0.0
    %800 = vmatprep.mubr.f32.mxu0 0.0
    %801 = vmatmul.mubr.f32.gmra.mxu0 %v731
    %v802 = vpop.f32.mrf.mxu0
    %v803 = vadd.f32 0.0, %v802
    %v804 = vpop.f32.mrf.mxu0
    %805 = vdwg.mxu0
    %v807 = vsel %vm292, %v407, 0
    %v810 = vsel %vm292, %v415, 0
    %812 = vmatprep.subr.mxu0 0.0
    %813 = vmatpush1.xpose.msra.mxu0 0.0
    %814 = vmatprep.subr.mxu0 0.0
    %815 = vmatpush1.xpose.msra.mxu0 0.0
    %816 = vmatprep.subr.mxu0 0.0
    %817 = vmatpush1.xpose.msra.mxu0 0.0
    %818 = vmatprep.subr.mxu0 0.0
    %819 = vmatpush1.xpose.msra.mxu0 0.0
    %820 = vmatprep.subr.mxu0 0.0
    %821 = vmatpush1.xpose.msra.mxu0 0.0
    %822 = vmatprep.subr.mxu0 0.0
    %823 = vmatpush1.xpose.msra.mxu0 0.0
    %824 = vmatprep.subr.mxu0 0.0
    %825 = vmatpush1.xpose.msra.mxu0 0.0
    %826 = vmatprep.subr.mxu0 0.0
    %827 = vmatpush1.xpose.msra.mxu0 0.0
    %828 = vmatprep.subr.mxu0 0.0
    %829 = vmatpush1.xpose.msra.mxu0 0.0
    %830 = vmatprep.subr.mxu0 0.0
    %831 = vmatpush1.xpose.msra.mxu0 0.0
    %832 = vmatprep.subr.mxu0 0.0
    %833 = vmatpush1.xpose.msra.mxu0 0.0
    %834 = vmatprep.subr.mxu0 0.0
    %835 = vmatpush1.xpose.msra.mxu0 0.0
    %836 = vmatprep.subr.mxu0 0.0
    %837 = vmatpush1.xpose.msra.mxu0 0.0
    %838 = vmatprep.subr.mxu0 0.0
    %839 = vmatpush1.xpose.msra.mxu0 0.0
    %840 = vmatprep.subr.mxu0 0.0
    %841 = vmatpush1.xpose.msra.mxu0 0.0
    %842 = vmatprep.subr.mxu0 0.0
    %843 = vmatpush1.xpose.msra.mxu0 %v810
    %844 = vmatprep.subr.mxu0 0.0
    %845 = vmatpush2.xpose.msra.mxu0 0.0
    %846 = vmatprep.subr.mxu0 0.0
    %847 = vmatpush2.xpose.msra.mxu0 0.0
    %848 = vmatprep.subr.mxu0 0.0
    %849 = vmatpush2.xpose.msra.mxu0 0.0
    %850 = vmatprep.subr.mxu0 0.0
    %851 = vmatpush2.xpose.msra.mxu0 0.0
    %852 = vmatprep.subr.mxu0 0.0
    %853 = vmatpush2.xpose.msra.mxu0 0.0
    %854 = vmatprep.subr.mxu0 0.0
    %855 = vmatpush2.xpose.msra.mxu0 0.0
    %856 = vmatprep.subr.mxu0 0.0
    %857 = vmatpush2.xpose.msra.mxu0 0.0
    %858 = vmatprep.subr.mxu0 0.0
    %859 = vmatpush2.xpose.msra.mxu0 0.0
    %860 = vmatprep.subr.mxu0 0.0
    %861 = vmatpush2.xpose.msra.mxu0 0.0
    %862 = vmatprep.subr.mxu0 0.0
    %863 = vmatpush2.xpose.msra.mxu0 0.0
    %864 = vmatprep.subr.mxu0 0.0
    %865 = vmatpush2.xpose.msra.mxu0 0.0
    %866 = vmatprep.subr.mxu0 0.0
    %867 = vmatpush2.xpose.msra.mxu0 0.0
    %868 = vmatprep.subr.mxu0 0.0
    %869 = vmatpush2.xpose.msra.mxu0 0.0
    %870 = vmatprep.subr.mxu0 0.0
    %871 = vmatpush2.xpose.msra.mxu0 0.0
    %872 = vmatprep.subr.mxu0 0.0
    %873 = vmatpush2.xpose.msra.mxu0 0.0
    %874 = vmatprep.subr.mxu0 0.0
    %875 = vmatpush2.xpose.msra.mxu0 0.0
    %876 = vmatprep.mubr.f32.mxu0 0.0
    %877 = vmatmul.mubr.f32.gmra.mxu0 %v807
    %v878 = vpop.f32.mrf.mxu0
    %v879 = vadd.f32 0.0, %v878
    %v880 = vpop.f32.mrf.mxu0
    %881 = vdwg.mxu0
    %v883 = vsel %vm292, %v408, 0
    %v886 = vsel %vm292, %v416, 0
    %888 = vmatprep.subr.mxu0 0.0
    %889 = vmatpush1.xpose.msra.mxu0 0.0
    %890 = vmatprep.subr.mxu0 0.0
    %891 = vmatpush1.xpose.msra.mxu0 0.0
    %892 = vmatprep.subr.mxu0 0.0
    %893 = vmatpush1.xpose.msra.mxu0 0.0
    %894 = vmatprep.subr.mxu0 0.0
    %895 = vmatpush1.xpose.msra.mxu0 0.0
    %896 = vmatprep.subr.mxu0 0.0
    %897 = vmatpush1.xpose.msra.mxu0 0.0
    %898 = vmatprep.subr.mxu0 0.0
    %899 = vmatpush1.xpose.msra.mxu0 0.0
    %900 = vmatprep.subr.mxu0 0.0
    %901 = vmatpush1.xpose.msra.mxu0 0.0
    %902 = vmatprep.subr.mxu0 0.0
    %903 = vmatpush1.xpose.msra.mxu0 0.0
    %904 = vmatprep.subr.mxu0 0.0
    %905 = vmatpush1.xpose.msra.mxu0 0.0
    %906 = vmatprep.subr.mxu0 0.0
    %907 = vmatpush1.xpose.msra.mxu0 0.0
    %908 = vmatprep.subr.mxu0 0.0
    %909 = vmatpush1.xpose.msra.mxu0 0.0
    %910 = vmatprep.subr.mxu0 0.0
    %911 = vmatpush1.xpose.msra.mxu0 0.0
    %912 = vmatprep.subr.mxu0 0.0
    %913 = vmatpush1.xpose.msra.mxu0 0.0
    %914 = vmatprep.subr.mxu0 0.0
    %915 = vmatpush1.xpose.msra.mxu0 0.0
    %916 = vmatprep.subr.mxu0 0.0
    %917 = vmatpush1.xpose.msra.mxu0 0.0
    %918 = vmatprep.subr.mxu0 0.0
    %919 = vmatpush1.xpose.msra.mxu0 %v886
    %920 = vmatprep.subr.mxu0 0.0
    %921 = vmatpush2.xpose.msra.mxu0 0.0
    %922 = vmatprep.subr.mxu0 0.0
    %923 = vmatpush2.xpose.msra.mxu0 0.0
    %924 = vmatprep.subr.mxu0 0.0
    %925 = vmatpush2.xpose.msra.mxu0 0.0
    %926 = vmatprep.subr.mxu0 0.0
    %927 = vmatpush2.xpose.msra.mxu0 0.0
    %928 = vmatprep.subr.mxu0 0.0
    %929 = vmatpush2.xpose.msra.mxu0 0.0
    %930 = vmatprep.subr.mxu0 0.0
    %931 = vmatpush2.xpose.msra.mxu0 0.0
    %932 = vmatprep.subr.mxu0 0.0
    %933 = vmatpush2.xpose.msra.mxu0 0.0
    %934 = vmatprep.subr.mxu0 0.0
    %935 = vmatpush2.xpose.msra.mxu0 0.0
    %936 = vmatprep.subr.mxu0 0.0
    %937 = vmatpush2.xpose.msra.mxu0 0.0
    %938 = vmatprep.subr.mxu0 0.0
    %939 = vmatpush2.xpose.msra.mxu0 0.0
    %940 = vmatprep.subr.mxu0 0.0
    %941 = vmatpush2.xpose.msra.mxu0 0.0
    %942 = vmatprep.subr.mxu0 0.0
    %943 = vmatpush2.xpose.msra.mxu0 0.0
    %944 = vmatprep.subr.mxu0 0.0
    %945 = vmatpush2.xpose.msra.mxu0 0.0
    %946 = vmatprep.subr.mxu0 0.0
    %947 = vmatpush2.xpose.msra.mxu0 0.0
    %948 = vmatprep.subr.mxu0 0.0
    %949 = vmatpush2.xpose.msra.mxu0 0.0
    %950 = vmatprep.subr.mxu0 0.0
    %951 = vmatpush2.xpose.msra.mxu0 0.0
    %952 = vmatprep.mubr.f32.mxu0 0.0
    %953 = vmatmul.mubr.f32.gmra.mxu0 %v883
    %v954 = vpop.f32.mrf.mxu0
    %v955 = vadd.f32 0.0, %v954
    %v956 = vpop.f32.mrf.mxu0
    %957 = vdwg.mxu0
    %v959 = vsel %vm292, %v409, 0
    %v962 = vsel %vm292, %v417, 0
    %964 = vmatprep.subr.mxu0 0.0
    %965 = vmatpush1.xpose.msra.mxu0 0.0
    %966 = vmatprep.subr.mxu0 0.0
    %967 = vmatpush1.xpose.msra.mxu0 0.0
    %968 = vmatprep.subr.mxu0 0.0
    %969 = vmatpush1.xpose.msra.mxu0 0.0
    %970 = vmatprep.subr.mxu0 0.0
    %971 = vmatpush1.xpose.msra.mxu0 0.0
    %972 = vmatprep.subr.mxu0 0.0
    %973 = vmatpush1.xpose.msra.mxu0 0.0
    %974 = vmatprep.subr.mxu0 0.0
    %975 = vmatpush1.xpose.msra.mxu0 0.0
    %976 = vmatprep.subr.mxu0 0.0
    %977 = vmatpush1.xpose.msra.mxu0 0.0
    %978 = vmatprep.subr.mxu0 0.0
    %979 = vmatpush1.xpose.msra.mxu0 0.0
    %980 = vmatprep.subr.mxu0 0.0
    %981 = vmatpush1.xpose.msra.mxu0 0.0
    %982 = vmatprep.subr.mxu0 0.0
    %983 = vmatpush1.xpose.msra.mxu0 0.0
    %984 = vmatprep.subr.mxu0 0.0
    %985 = vmatpush1.xpose.msra.mxu0 0.0
    %986 = vmatprep.subr.mxu0 0.0
    %987 = vmatpush1.xpose.msra.mxu0 0.0
    %988 = vmatprep.subr.mxu0 0.0
    %989 = vmatpush1.xpose.msra.mxu0 0.0
    %990 = vmatprep.subr.mxu0 0.0
    %991 = vmatpush1.xpose.msra.mxu0 0.0
    %992 = vmatprep.subr.mxu0 0.0
    %993 = vmatpush1.xpose.msra.mxu0 0.0
    %994 = vmatprep.subr.mxu0 0.0
    %995 = vmatpush1.xpose.msra.mxu0 %v962
    %996 = vmatprep.subr.mxu0 0.0
    %997 = vmatpush2.xpose.msra.mxu0 0.0
    %998 = vmatprep.subr.mxu0 0.0
    %999 = vmatpush2.xpose.msra.mxu0 0.0
    %1000 = vmatprep.subr.mxu0 0.0
    %1001 = vmatpush2.xpose.msra.mxu0 0.0
    %1002 = vmatprep.subr.mxu0 0.0
    %1003 = vmatpush2.xpose.msra.mxu0 0.0
    %1004 = vmatprep.subr.mxu0 0.0
    %1005 = vmatpush2.xpose.msra.mxu0 0.0
    %1006 = vmatprep.subr.mxu0 0.0
    %1007 = vmatpush2.xpose.msra.mxu0 0.0
    %1008 = vmatprep.subr.mxu0 0.0
    %1009 = vmatpush2.xpose.msra.mxu0 0.0
    %1010 = vmatprep.subr.mxu0 0.0
    %1011 = vmatpush2.xpose.msra.mxu0 0.0
    %1012 = vmatprep.subr.mxu0 0.0
    %1013 = vmatpush2.xpose.msra.mxu0 0.0
    %1014 = vmatprep.subr.mxu0 0.0
    %1015 = vmatpush2.xpose.msra.mxu0 0.0
    %1016 = vmatprep.subr.mxu0 0.0
    %1017 = vmatpush2.xpose.msra.mxu0 0.0
    %1018 = vmatprep.subr.mxu0 0.0
    %1019 = vmatpush2.xpose.msra.mxu0 0.0
    %1020 = vmatprep.subr.mxu0 0.0
    %1021 = vmatpush2.xpose.msra.mxu0 0.0
    %1022 = vmatprep.subr.mxu0 0.0
    %1023 = vmatpush2.xpose.msra.mxu0 0.0
    %1024 = vmatprep.subr.mxu0 0.0
    %1025 = vmatpush2.xpose.msra.mxu0 0.0
    %1026 = vmatprep.subr.mxu0 0.0
    %1027 = vmatpush2.xpose.msra.mxu0 0.0
    %1028 = vmatprep.mubr.f32.mxu0 0.0
    %1029 = vmatmul.mubr.f32.gmra.mxu0 %v959
    %v1030 = vpop.f32.mrf.mxu0
    %v1031 = vadd.f32 0.0, %v1030
    %v1032 = vpop.f32.mrf.mxu0
    %1033 = vdwg.mxu0
    %v1034 = vmul.f32 %v499, 0.35355338
    %v1035 = vmul.f32 %v575, 0.35355338
    %v1036 = vmul.f32 %v651, 0.35355338
    %v1037 = vmul.f32 %v727, 0.35355338
    %v1038 = vmul.f32 %v803, 0.35355338
    %v1039 = vmul.f32 %v879, 0.35355338
    %v1040 = vmul.f32 %v955, 0.35355338
    %v1041 = vmul.f32 %v1031, 0.35355338
    %v1042 = vsel %vm292, %v1034, -inf
    %1043 = vmax.xlane.f32.xlu0 %v1042
    %v1044 = vpop.xlane.xlu0 %1043
    %v1045 = vsel %vm292, %v1035, -inf
    %1046 = vmax.xlane.f32.xlu0 %v1045
    %v1047 = vpop.xlane.xlu0 %1046
    %v1048 = vsel %vm292, %v1036, -inf
    %1049 = vmax.xlane.f32.xlu0 %v1048
    %v1050 = vpop.xlane.xlu0 %1049
    %v1051 = vsel %vm292, %v1037, -inf
    %1052 = vmax.xlane.f32.xlu0 %v1051
    %v1053 = vpop.xlane.xlu0 %1052
    %v1054 = vsel %vm292, %v1038, -inf
    %1055 = vmax.xlane.f32.xlu0 %v1054
    %v1056 = vpop.xlane.xlu0 %1055
    %v1057 = vsel %vm292, %v1039, -inf
    %1058 = vmax.xlane.f32.xlu0 %v1057
    %v1059 = vpop.xlane.xlu0 %1058
    %v1060 = vsel %vm292, %v1040, -inf
    %1061 = vmax.xlane.f32.xlu0 %v1060
    %v1062 = vpop.xlane.xlu0 %1061
    %v1063 = vsel %vm292, %v1041, -inf
    %1064 = vmax.xlane.f32.xlu0 %v1063
    %v1065 = vpop.xlane.xlu0 %1064
    %v1066 = vsub.f32 %v1034, %v1044
    %v1067 = vsub.f32 %v1035, %v1047
    %v1068 = vsub.f32 %v1036, %v1050
    %v1069 = vsub.f32 %v1037, %v1053
    %v1070 = vsub.f32 %v1038, %v1056
    %v1071 = vsub.f32 %v1039, %v1059
    %v1072 = vsub.f32 %v1040, %v1062
    %v1073 = vsub.f32 %v1041, %v1065
    %v1074 = vmul.f32 %v1066, 1.442695
    %v1075 = vpow.pop %v1074
    %v1076 = vmul.f32 %v1067, 1.442695
    %v1077 = vpow.pop %v1076
    %v1078 = vmul.f32 %v1068, 1.442695
    %v1079 = vpow.pop %v1078
    %v1080 = vmul.f32 %v1069, 1.442695
    %v1081 = vpow.pop %v1080
    %v1082 = vmul.f32 %v1070, 1.442695
    %v1083 = vpow.pop %v1082
    %v1084 = vmul.f32 %v1071, 1.442695
    %v1085 = vpow.pop %v1084
    %v1086 = vmul.f32 %v1072, 1.442695
    %v1087 = vpow.pop %v1086
    %v1088 = vmul.f32 %v1073, 1.442695
    %v1089 = vpow.pop %v1088
    %v1090 = vsel %vm292, %v1075, 0.0
    %1091 = vadd.xlane.f32.xlu0 %v1090
    %v1092 = vpop.xlane.xlu0 %1091
    %v1093 = vsel %vm292, %v1077, 0.0
    %1094 = vadd.xlane.f32.xlu0 %v1093
    %v1095 = vpop.xlane.xlu0 %1094
    %v1096 = vsel %vm292, %v1079, 0.0
    %1097 = vadd.xlane.f32.xlu0 %v1096
    %v1098 = vpop.xlane.xlu0 %1097
    %v1099 = vsel %vm292, %v1081, 0.0
    %1100 = vadd.xlane.f32.xlu0 %v1099
    %v1101 = vpop.xlane.xlu0 %1100
    %v1102 = vsel %vm292, %v1083, 0.0
    %1103 = vadd.xlane.f32.xlu0 %v1102
    %v1104 = vpop.xlane.xlu0 %1103
    %v1105 = vsel %vm292, %v1085, 0.0
    %1106 = vadd.xlane.f32.xlu0 %v1105
    %v1107 = vpop.xlane.xlu0 %1106
    %v1108 = vsel %vm292, %v1087, 0.0
    %1109 = vadd.xlane.f32.xlu0 %v1108
    %v1110 = vpop.xlane.xlu0 %1109
    %v1111 = vsel %vm292, %v1089, 0.0
    %1112 = vadd.xlane.f32.xlu0 %v1111
    %v1113 = vpop.xlane.xlu0 %1112
    %v1114 = vrcp.pop %v1092
    %v1115 = vrcp.pop %v1095
    %v1116 = vrcp.pop %v1098
    %v1117 = vrcp.pop %v1101
    %v1118 = vrcp.pop %v1104
    %v1119 = vrcp.pop %v1107
    %v1120 = vrcp.pop %v1110
    %v1121 = vrcp.pop %v1113
    %v1122 = vmul.f32 %v1075, %v1114
    %v1123 = vmul.f32 %v1077, %v1115
    %v1124 = vmul.f32 %v1079, %v1116
    %v1125 = vmul.f32 %v1081, %v1117
    %v1126 = vmul.f32 %v1083, %v1118
    %v1127 = vmul.f32 %v1085, %v1119
    %v1128 = vmul.f32 %v1087, %v1120
    %v1129 = vmul.f32 %v1089, %v1121
    %v1131 = vsel %vm292, %v1122, 0
    %1133 = vmatprep.subr.mxu0 0.0
    %1134 = vmatpush1.msra.mxu0 0.0
    %1135 = vmatprep.subr.mxu0 0.0
    %1136 = vmatpush1.msra.mxu0 0.0
    %1137 = vmatprep.subr.mxu0 0.0
    %1138 = vmatpush1.msra.mxu0 0.0
    %1139 = vmatprep.subr.mxu0 0.0
    %1140 = vmatpush1.msra.mxu0 0.0
    %1141 = vmatprep.subr.mxu0 0.0
    %1142 = vmatpush1.msra.mxu0 0.0
    %1143 = vmatprep.subr.mxu0 0.0
    %1144 = vmatpush1.msra.mxu0 0.0
    %1145 = vmatprep.subr.mxu0 0.0
    %1146 = vmatpush1.msra.mxu0 0.0
    %1147 = vmatprep.subr.mxu0 0.0
    %1148 = vmatpush1.msra.mxu0 0.0
    %1149 = vmatprep.subr.mxu0 0.0
    %1150 = vmatpush1.msra.mxu0 0.0
    %1151 = vmatprep.subr.mxu0 0.0
    %1152 = vmatpush1.msra.mxu0 0.0
    %1153 = vmatprep.subr.mxu0 0.0
    %1154 = vmatpush1.msra.mxu0 0.0
    %1155 = vmatprep.subr.mxu0 0.0
    %1156 = vmatpush1.msra.mxu0 0.0
    %1157 = vmatprep.subr.mxu0 0.0
    %1158 = vmatpush1.msra.mxu0 0.0
    %1159 = vmatprep.subr.mxu0 0.0
    %1160 = vmatpush1.msra.mxu0 0.0
    %1161 = vmatprep.subr.mxu0 0.0
    %1162 = vmatpush1.msra.mxu0 0.0
    %1163 = vmatprep.subr.mxu0 0.0
    %1164 = vmatpush1.msra.mxu0 %v418
    %1165 = vmatprep.subr.mxu0 0.0
    %1166 = vmatpush2.msra.mxu0 0.0
    %1167 = vmatprep.subr.mxu0 0.0
    %1168 = vmatpush2.msra.mxu0 0.0
    %1169 = vmatprep.subr.mxu0 0.0
    %1170 = vmatpush2.msra.mxu0 0.0
    %1171 = vmatprep.subr.mxu0 0.0
    %1172 = vmatpush2.msra.mxu0 0.0
    %1173 = vmatprep.subr.mxu0 0.0
    %1174 = vmatpush2.msra.mxu0 0.0
    %1175 = vmatprep.subr.mxu0 0.0
    %1176 = vmatpush2.msra.mxu0 0.0
    %1177 = vmatprep.subr.mxu0 0.0
    %1178 = vmatpush2.msra.mxu0 0.0
    %1179 = vmatprep.subr.mxu0 0.0
    %1180 = vmatpush2.msra.mxu0 0.0
    %1181 = vmatprep.subr.mxu0 0.0
    %1182 = vmatpush2.msra.mxu0 0.0
    %1183 = vmatprep.subr.mxu0 0.0
    %1184 = vmatpush2.msra.mxu0 0.0
    %1185 = vmatprep.subr.mxu0 0.0
    %1186 = vmatpush2.msra.mxu0 0.0
    %1187 = vmatprep.subr.mxu0 0.0
    %1188 = vmatpush2.msra.mxu0 0.0
    %1189 = vmatprep.subr.mxu0 0.0
    %1190 = vmatpush2.msra.mxu0 0.0
    %1191 = vmatprep.subr.mxu0 0.0
    %1192 = vmatpush2.msra.mxu0 0.0
    %1193 = vmatprep.subr.mxu0 0.0
    %1194 = vmatpush2.msra.mxu0 0.0
    %1195 = vmatprep.subr.mxu0 0.0
    %1196 = vmatpush2.msra.mxu0 0.0
    %1197 = vmatprep.mubr.f32.mxu0 0.0
    %1198 = vmatmul.mubr.f32.gmra.mxu0 %v1131
    %v1199 = vpop.f32.mrf.mxu0
    %v1200 = vadd.f32 0.0, %v1199
    %v1201 = vpop.f32.mrf.mxu0
    %1202 = vdwg.mxu0
    %v1204 = vsel %vm292, %v1123, 0
    %1206 = vmatprep.subr.mxu0 0.0
    %1207 = vmatpush1.msra.mxu0 0.0
    %1208 = vmatprep.subr.mxu0 0.0
    %1209 = vmatpush1.msra.mxu0 0.0
    %1210 = vmatprep.subr.mxu0 0.0
    %1211 = vmatpush1.msra.mxu0 0.0
    %1212 = vmatprep.subr.mxu0 0.0
    %1213 = vmatpush1.msra.mxu0 0.0
    %1214 = vmatprep.subr.mxu0 0.0
    %1215 = vmatpush1.msra.mxu0 0.0
    %1216 = vmatprep.subr.mxu0 0.0
    %1217 = vmatpush1.msra.mxu0 0.0
    %1218 = vmatprep.subr.mxu0 0.0
    %1219 = vmatpush1.msra.mxu0 0.0
    %1220 = vmatprep.subr.mxu0 0.0
    %1221 = vmatpush1.msra.mxu0 0.0
    %1222 = vmatprep.subr.mxu0 0.0
    %1223 = vmatpush1.msra.mxu0 0.0
    %1224 = vmatprep.subr.mxu0 0.0
    %1225 = vmatpush1.msra.mxu0 0.0
    %1226 = vmatprep.subr.mxu0 0.0
    %1227 = vmatpush1.msra.mxu0 0.0
    %1228 = vmatprep.subr.mxu0 0.0
    %1229 = vmatpush1.msra.mxu0 0.0
    %1230 = vmatprep.subr.mxu0 0.0
    %1231 = vmatpush1.msra.mxu0 0.0
    %1232 = vmatprep.subr.mxu0 0.0
    %1233 = vmatpush1.msra.mxu0 0.0
    %1234 = vmatprep.subr.mxu0 0.0
    %1235 = vmatpush1.msra.mxu0 0.0
    %1236 = vmatprep.subr.mxu0 0.0
    %1237 = vmatpush1.msra.mxu0 %v419
    %1238 = vmatprep.subr.mxu0 0.0
    %1239 = vmatpush2.msra.mxu0 0.0
    %1240 = vmatprep.subr.mxu0 0.0
    %1241 = vmatpush2.msra.mxu0 0.0
    %1242 = vmatprep.subr.mxu0 0.0
    %1243 = vmatpush2.msra.mxu0 0.0
    %1244 = vmatprep.subr.mxu0 0.0
    %1245 = vmatpush2.msra.mxu0 0.0
    %1246 = vmatprep.subr.mxu0 0.0
    %1247 = vmatpush2.msra.mxu0 0.0
    %1248 = vmatprep.subr.mxu0 0.0
    %1249 = vmatpush2.msra.mxu0 0.0
    %1250 = vmatprep.subr.mxu0 0.0
    %1251 = vmatpush2.msra.mxu0 0.0
    %1252 = vmatprep.subr.mxu0 0.0
    %1253 = vmatpush2.msra.mxu0 0.0
    %1254 = vmatprep.subr.mxu0 0.0
    %1255 = vmatpush2.msra.mxu0 0.0
    %1256 = vmatprep.subr.mxu0 0.0
    %1257 = vmatpush2.msra.mxu0 0.0
    %1258 = vmatprep.subr.mxu0 0.0
    %1259 = vmatpush2.msra.mxu0 0.0
    %1260 = vmatprep.subr.mxu0 0.0
    %1261 = vmatpush2.msra.mxu0 0.0
    %1262 = vmatprep.subr.mxu0 0.0
    %1263 = vmatpush2.msra.mxu0 0.0
    %1264 = vmatprep.subr.mxu0 0.0
    %1265 = vmatpush2.msra.mxu0 0.0
    %1266 = vmatprep.subr.mxu0 0.0
    %1267 = vmatpush2.msra.mxu0 0.0
    %1268 = vmatprep.subr.mxu0 0.0
    %1269 = vmatpush2.msra.mxu0 0.0
    %1270 = vmatprep.mubr.f32.mxu0 0.0
    %1271 = vmatmul.mubr.f32.gmra.mxu0 %v1204
    %v1272 = vpop.f32.mrf.mxu0
    %v1273 = vadd.f32 0.0, %v1272
    %v1274 = vpop.f32.mrf.mxu0
    %1275 = vdwg.mxu0
    %v1277 = vsel %vm292, %v1124, 0
    %1279 = vmatprep.subr.mxu0 0.0
    %1280 = vmatpush1.msra.mxu0 0.0
    %1281 = vmatprep.subr.mxu0 0.0
    %1282 = vmatpush1.msra.mxu0 0.0
    %1283 = vmatprep.subr.mxu0 0.0
    %1284 = vmatpush1.msra.mxu0 0.0
    %1285 = vmatprep.subr.mxu0 0.0
    %1286 = vmatpush1.msra.mxu0 0.0
    %1287 = vmatprep.subr.mxu0 0.0
    %1288 = vmatpush1.msra.mxu0 0.0
    %1289 = vmatprep.subr.mxu0 0.0
    %1290 = vmatpush1.msra.mxu0 0.0
    %1291 = vmatprep.subr.mxu0 0.0
    %1292 = vmatpush1.msra.mxu0 0.0
    %1293 = vmatprep.subr.mxu0 0.0
    %1294 = vmatpush1.msra.mxu0 0.0
    %1295 = vmatprep.subr.mxu0 0.0
    %1296 = vmatpush1.msra.mxu0 0.0
    %1297 = vmatprep.subr.mxu0 0.0
    %1298 = vmatpush1.msra.mxu0 0.0
    %1299 = vmatprep.subr.mxu0 0.0
    %1300 = vmatpush1.msra.mxu0 0.0
    %1301 = vmatprep.subr.mxu0 0.0
    %1302 = vmatpush1.msra.mxu0 0.0
    %1303 = vmatprep.subr.mxu0 0.0
    %1304 = vmatpush1.msra.mxu0 0.0
    %1305 = vmatprep.subr.mxu0 0.0
    %1306 = vmatpush1.msra.mxu0 0.0
    %1307 = vmatprep.subr.mxu0 0.0
    %1308 = vmatpush1.msra.mxu0 0.0
    %1309 = vmatprep.subr.mxu0 0.0
    %1310 = vmatpush1.msra.mxu0 %v420
    %1311 = vmatprep.subr.mxu0 0.0
    %1312 = vmatpush2.msra.mxu0 0.0
    %1313 = vmatprep.subr.mxu0 0.0
    %1314 = vmatpush2.msra.mxu0 0.0
    %1315 = vmatprep.subr.mxu0 0.0
    %1316 = vmatpush2.msra.mxu0 0.0
    %1317 = vmatprep.subr.mxu0 0.0
    %1318 = vmatpush2.msra.mxu0 0.0
    %1319 = vmatprep.subr.mxu0 0.0
    %1320 = vmatpush2.msra.mxu0 0.0
    %1321 = vmatprep.subr.mxu0 0.0
    %1322 = vmatpush2.msra.mxu0 0.0
    %1323 = vmatprep.subr.mxu0 0.0
    %1324 = vmatpush2.msra.mxu0 0.0
    %1325 = vmatprep.subr.mxu0 0.0
    %1326 = vmatpush2.msra.mxu0 0.0
    %1327 = vmatprep.subr.mxu0 0.0
    %1328 = vmatpush2.msra.mxu0 0.0
    %1329 = vmatprep.subr.mxu0 0.0
    %1330 = vmatpush2.msra.mxu0 0.0
    %1331 = vmatprep.subr.mxu0 0.0
    %1332 = vmatpush2.msra.mxu0 0.0
    %1333 = vmatprep.subr.mxu0 0.0
    %1334 = vmatpush2.msra.mxu0 0.0
    %1335 = vmatprep.subr.mxu0 0.0
    %1336 = vmatpush2.msra.mxu0 0.0
    %1337 = vmatprep.subr.mxu0 0.0
    %1338 = vmatpush2.msra.mxu0 0.0
    %1339 = vmatprep.subr.mxu0 0.0
    %1340 = vmatpush2.msra.mxu0 0.0
    %1341 = vmatprep.subr.mxu0 0.0
    %1342 = vmatpush2.msra.mxu0 0.0
    %1343 = vmatprep.mubr.f32.mxu0 0.0
    %1344 = vmatmul.mubr.f32.gmra.mxu0 %v1277
    %v1345 = vpop.f32.mrf.mxu0
    %v1346 = vadd.f32 0.0, %v1345
    %v1347 = vpop.f32.mrf.mxu0
    %1348 = vdwg.mxu0
    %v1350 = vsel %vm292, %v1125, 0
    %1352 = vmatprep.subr.mxu0 0.0
    %1353 = vmatpush1.msra.mxu0 0.0
    %1354 = vmatprep.subr.mxu0 0.0
    %1355 = vmatpush1.msra.mxu0 0.0
    %1356 = vmatprep.subr.mxu0 0.0
    %1357 = vmatpush1.msra.mxu0 0.0
    %1358 = vmatprep.subr.mxu0 0.0
    %1359 = vmatpush1.msra.mxu0 0.0
    %1360 = vmatprep.subr.mxu0 0.0
    %1361 = vmatpush1.msra.mxu0 0.0
    %1362 = vmatprep.subr.mxu0 0.0
    %1363 = vmatpush1.msra.mxu0 0.0
    %1364 = vmatprep.subr.mxu0 0.0
    %1365 = vmatpush1.msra.mxu0 0.0
    %1366 = vmatprep.subr.mxu0 0.0
    %1367 = vmatpush1.msra.mxu0 0.0
    %1368 = vmatprep.subr.mxu0 0.0
    %1369 = vmatpush1.msra.mxu0 0.0
    %1370 = vmatprep.subr.mxu0 0.0
    %1371 = vmatpush1.msra.mxu0 0.0
    %1372 = vmatprep.subr.mxu0 0.0
    %1373 = vmatpush1.msra.mxu0 0.0
    %1374 = vmatprep.subr.mxu0 0.0
    %1375 = vmatpush1.msra.mxu0 0.0
    %1376 = vmatprep.subr.mxu0 0.0
    %1377 = vmatpush1.msra.mxu0 0.0
    %1378 = vmatprep.subr.mxu0 0.0
    %1379 = vmatpush1.msra.mxu0 0.0
    %1380 = vmatprep.subr.mxu0 0.0
    %1381 = vmatpush1.msra.mxu0 0.0
    %1382 = vmatprep.subr.mxu0 0.0
    %1383 = vmatpush1.msra.mxu0 %v421
    %1384 = vmatprep.subr.mxu0 0.0
    %1385 = vmatpush2.msra.mxu0 0.0
    %1386 = vmatprep.subr.mxu0 0.0
    %1387 = vmatpush2.msra.mxu0 0.0
    %1388 = vmatprep.subr.mxu0 0.0
    %1389 = vmatpush2.msra.mxu0 0.0
    %1390 = vmatprep.subr.mxu0 0.0
    %1391 = vmatpush2.msra.mxu0 0.0
    %1392 = vmatprep.subr.mxu0 0.0
    %1393 = vmatpush2.msra.mxu0 0.0
    %1394 = vmatprep.subr.mxu0 0.0
    %1395 = vmatpush2.msra.mxu0 0.0
    %1396 = vmatprep.subr.mxu0 0.0
    %1397 = vmatpush2.msra.mxu0 0.0
    %1398 = vmatprep.subr.mxu0 0.0
    %1399 = vmatpush2.msra.mxu0 0.0
    %1400 = vmatprep.subr.mxu0 0.0
    %1401 = vmatpush2.msra.mxu0 0.0
    %1402 = vmatprep.subr.mxu0 0.0
    %1403 = vmatpush2.msra.mxu0 0.0
    %1404 = vmatprep.subr.mxu0 0.0
    %1405 = vmatpush2.msra.mxu0 0.0
    %1406 = vmatprep.subr.mxu0 0.0
    %1407 = vmatpush2.msra.mxu0 0.0
    %1408 = vmatprep.subr.mxu0 0.0
    %1409 = vmatpush2.msra.mxu0 0.0
    %1410 = vmatprep.subr.mxu0 0.0
    %1411 = vmatpush2.msra.mxu0 0.0
    %1412 = vmatprep.subr.mxu0 0.0
    %1413 = vmatpush2.msra.mxu0 0.0
    %1414 = vmatprep.subr.mxu0 0.0
    %1415 = vmatpush2.msra.mxu0 0.0
    %1416 = vmatprep.mubr.f32.mxu0 0.0
    %1417 = vmatmul.mubr.f32.gmra.mxu0 %v1350
    %v1418 = vpop.f32.mrf.mxu0
    %v1419 = vadd.f32 0.0, %v1418
    %v1420 = vpop.f32.mrf.mxu0
    %1421 = vdwg.mxu0
    %v1423 = vsel %vm292, %v1126, 0
    %1425 = vmatprep.subr.mxu0 0.0
    %1426 = vmatpush1.msra.mxu0 0.0
    %1427 = vmatprep.subr.mxu0 0.0
    %1428 = vmatpush1.msra.mxu0 0.0
    %1429 = vmatprep.subr.mxu0 0.0
    %1430 = vmatpush1.msra.mxu0 0.0
    %1431 = vmatprep.subr.mxu0 0.0
    %1432 = vmatpush1.msra.mxu0 0.0
    %1433 = vmatprep.subr.mxu0 0.0
    %1434 = vmatpush1.msra.mxu0 0.0
    %1435 = vmatprep.subr.mxu0 0.0
    %1436 = vmatpush1.msra.mxu0 0.0
    %1437 = vmatprep.subr.mxu0 0.0
    %1438 = vmatpush1.msra.mxu0 0.0
    %1439 = vmatprep.subr.mxu0 0.0
    %1440 = vmatpush1.msra.mxu0 0.0
    %1441 = vmatprep.subr.mxu0 0.0
    %1442 = vmatpush1.msra.mxu0 0.0
    %1443 = vmatprep.subr.mxu0 0.0
    %1444 = vmatpush1.msra.mxu0 0.0
    %1445 = vmatprep.subr.mxu0 0.0
    %1446 = vmatpush1.msra.mxu0 0.0
    %1447 = vmatprep.subr.mxu0 0.0
    %1448 = vmatpush1.msra.mxu0 0.0
    %1449 = vmatprep.subr.mxu0 0.0
    %1450 = vmatpush1.msra.mxu0 0.0
    %1451 = vmatprep.subr.mxu0 0.0
    %1452 = vmatpush1.msra.mxu0 0.0
    %1453 = vmatprep.subr.mxu0 0.0
    %1454 = vmatpush1.msra.mxu0 0.0
    %1455 = vmatprep.subr.mxu0 0.0
    %1456 = vmatpush1.msra.mxu0 %v422
    %1457 = vmatprep.subr.mxu0 0.0
    %1458 = vmatpush2.msra.mxu0 0.0
    %1459 = vmatprep.subr.mxu0 0.0
    %1460 = vmatpush2.msra.mxu0 0.0
    %1461 = vmatprep.subr.mxu0 0.0
    %1462 = vmatpush2.msra.mxu0 0.0
    %1463 = vmatprep.subr.mxu0 0.0
    %1464 = vmatpush2.msra.mxu0 0.0
    %1465 = vmatprep.subr.mxu0 0.0
    %1466 = vmatpush2.msra.mxu0 0.0
    %1467 = vmatprep.subr.mxu0 0.0
    %1468 = vmatpush2.msra.mxu0 0.0
    %1469 = vmatprep.subr.mxu0 0.0
    %1470 = vmatpush2.msra.mxu0 0.0
    %1471 = vmatprep.subr.mxu0 0.0
    %1472 = vmatpush2.msra.mxu0 0.0
    %1473 = vmatprep.subr.mxu0 0.0
    %1474 = vmatpush2.msra.mxu0 0.0
    %1475 = vmatprep.subr.mxu0 0.0
    %1476 = vmatpush2.msra.mxu0 0.0
    %1477 = vmatprep.subr.mxu0 0.0
    %1478 = vmatpush2.msra.mxu0 0.0
    %1479 = vmatprep.subr.mxu0 0.0
    %1480 = vmatpush2.msra.mxu0 0.0
    %1481 = vmatprep.subr.mxu0 0.0
    %1482 = vmatpush2.msra.mxu0 0.0
    %1483 = vmatprep.subr.mxu0 0.0
    %1484 = vmatpush2.msra.mxu0 0.0
    %1485 = vmatprep.subr.mxu0 0.0
    %1486 = vmatpush2.msra.mxu0 0.0
    %1487 = vmatprep.subr.mxu0 0.0
    %1488 = vmatpush2.msra.mxu0 0.0
    %1489 = vmatprep.mubr.f32.mxu0 0.0
    %1490 = vmatmul.mubr.f32.gmra.mxu0 %v1423
    %v1491 = vpop.f32.mrf.mxu0
    %v1492 = vadd.f32 0.0, %v1491
    %v1493 = vpop.f32.mrf.mxu0
    %1494 = vdwg.mxu0
    %v1496 = vsel %vm292, %v1127, 0
    %1498 = vmatprep.subr.mxu0 0.0
    %1499 = vmatpush1.msra.mxu0 0.0
    %1500 = vmatprep.subr.mxu0 0.0
    %1501 = vmatpush1.msra.mxu0 0.0
    %1502 = vmatprep.subr.mxu0 0.0
    %1503 = vmatpush1.msra.mxu0 0.0
    %1504 = vmatprep.subr.mxu0 0.0
    %1505 = vmatpush1.msra.mxu0 0.0
    %1506 = vmatprep.subr.mxu0 0.0
    %1507 = vmatpush1.msra.mxu0 0.0
    %1508 = vmatprep.subr.mxu0 0.0
    %1509 = vmatpush1.msra.mxu0 0.0
    %1510 = vmatprep.subr.mxu0 0.0
    %1511 = vmatpush1.msra.mxu0 0.0
    %1512 = vmatprep.subr.mxu0 0.0
    %1513 = vmatpush1.msra.mxu0 0.0
    %1514 = vmatprep.subr.mxu0 0.0
    %1515 = vmatpush1.msra.mxu0 0.0
    %1516 = vmatprep.subr.mxu0 0.0
    %1517 = vmatpush1.msra.mxu0 0.0
    %1518 = vmatprep.subr.mxu0 0.0
    %1519 = vmatpush1.msra.mxu0 0.0
    %1520 = vmatprep.subr.mxu0 0.0
    %1521 = vmatpush1.msra.mxu0 0.0
    %1522 = vmatprep.subr.mxu0 0.0
    %1523 = vmatpush1.msra.mxu0 0.0
    %1524 = vmatprep.subr.mxu0 0.0
    %1525 = vmatpush1.msra.mxu0 0.0
    %1526 = vmatprep.subr.mxu0 0.0
    %1527 = vmatpush1.msra.mxu0 0.0
    %1528 = vmatprep.subr.mxu0 0.0
    %1529 = vmatpush1.msra.mxu0 %v423
    %1530 = vmatprep.subr.mxu0 0.0
    %1531 = vmatpush2.msra.mxu0 0.0
    %1532 = vmatprep.subr.mxu0 0.0
    %1533 = vmatpush2.msra.mxu0 0.0
    %1534 = vmatprep.subr.mxu0 0.0
    %1535 = vmatpush2.msra.mxu0 0.0
    %1536 = vmatprep.subr.mxu0 0.0
    %1537 = vmatpush2.msra.mxu0 0.0
    %1538 = vmatprep.subr.mxu0 0.0
    %1539 = vmatpush2.msra.mxu0 0.0
    %1540 = vmatprep.subr.mxu0 0.0
    %1541 = vmatpush2.msra.mxu0 0.0
    %1542 = vmatprep.subr.mxu0 0.0
    %1543 = vmatpush2.msra.mxu0 0.0
    %1544 = vmatprep.subr.mxu0 0.0
    %1545 = vmatpush2.msra.mxu0 0.0
    %1546 = vmatprep.subr.mxu0 0.0
    %1547 = vmatpush2.msra.mxu0 0.0
    %1548 = vmatprep.subr.mxu0 0.0
    %1549 = vmatpush2.msra.mxu0 0.0
    %1550 = vmatprep.subr.mxu0 0.0
    %1551 = vmatpush2.msra.mxu0 0.0
    %1552 = vmatprep.subr.mxu0 0.0
    %1553 = vmatpush2.msra.mxu0 0.0
    %1554 = vmatprep.subr.mxu0 0.0
    %1555 = vmatpush2.msra.mxu0 0.0
    %1556 = vmatprep.subr.mxu0 0.0
    %1557 = vmatpush2.msra.mxu0 0.0
    %1558 = vmatprep.subr.mxu0 0.0
    %1559 = vmatpush2.msra.mxu0 0.0
    %1560 = vmatprep.subr.mxu0 0.0
    %1561 = vmatpush2.msra.mxu0 0.0
    %1562 = vmatprep.mubr.f32.mxu0 0.0
    %1563 = vmatmul.mubr.f32.gmra.mxu0 %v1496
    %v1564 = vpop.f32.mrf.mxu0
    %v1565 = vadd.f32 0.0, %v1564
    %v1566 = vpop.f32.mrf.mxu0
    %1567 = vdwg.mxu0
    %v1569 = vsel %vm292, %v1128, 0
    %1571 = vmatprep.subr.mxu0 0.0
    %1572 = vmatpush1.msra.mxu0 0.0
    %1573 = vmatprep.subr.mxu0 0.0
    %1574 = vmatpush1.msra.mxu0 0.0
    %1575 = vmatprep.subr.mxu0 0.0
    %1576 = vmatpush1.msra.mxu0 0.0
    %1577 = vmatprep.subr.mxu0 0.0
    %1578 = vmatpush1.msra.mxu0 0.0
    %1579 = vmatprep.subr.mxu0 0.0
    %1580 = vmatpush1.msra.mxu0 0.0
    %1581 = vmatprep.subr.mxu0 0.0
    %1582 = vmatpush1.msra.mxu0 0.0
    %1583 = vmatprep.subr.mxu0 0.0
    %1584 = vmatpush1.msra.mxu0 0.0
    %1585 = vmatprep.subr.mxu0 0.0
    %1586 = vmatpush1.msra.mxu0 0.0
    %1587 = vmatprep.subr.mxu0 0.0
    %1588 = vmatpush1.msra.mxu0 0.0
    %1589 = vmatprep.subr.mxu0 0.0
    %1590 = vmatpush1.msra.mxu0 0.0
    %1591 = vmatprep.subr.mxu0 0.0
    %1592 = vmatpush1.msra.mxu0 0.0
    %1593 = vmatprep.subr.mxu0 0.0
    %1594 = vmatpush1.msra.mxu0 0.0
    %1595 = vmatprep.subr.mxu0 0.0
    %1596 = vmatpush1.msra.mxu0 0.0
    %1597 = vmatprep.subr.mxu0 0.0
    %1598 = vmatpush1.msra.mxu0 0.0
    %1599 = vmatprep.subr.mxu0 0.0
    %1600 = vmatpush1.msra.mxu0 0.0
    %1601 = vmatprep.subr.mxu0 0.0
    %1602 = vmatpush1.msra.mxu0 %v424
    %1603 = vmatprep.subr.mxu0 0.0
    %1604 = vmatpush2.msra.mxu0 0.0
    %1605 = vmatprep.subr.mxu0 0.0
    %1606 = vmatpush2.msra.mxu0 0.0
    %1607 = vmatprep.subr.mxu0 0.0
    %1608 = vmatpush2.msra.mxu0 0.0
    %1609 = vmatprep.subr.mxu0 0.0
    %1610 = vmatpush2.msra.mxu0 0.0
    %1611 = vmatprep.subr.mxu0 0.0
    %1612 = vmatpush2.msra.mxu0 0.0
    %1613 = vmatprep.subr.mxu0 0.0
    %1614 = vmatpush2.msra.mxu0 0.0
    %1615 = vmatprep.subr.mxu0 0.0
    %1616 = vmatpush2.msra.mxu0 0.0
    %1617 = vmatprep.subr.mxu0 0.0
    %1618 = vmatpush2.msra.mxu0 0.0
    %1619 = vmatprep.subr.mxu0 0.0
    %1620 = vmatpush2.msra.mxu0 0.0
    %1621 = vmatprep.subr.mxu0 0.0
    %1622 = vmatpush2.msra.mxu0 0.0
    %1623 = vmatprep.subr.mxu0 0.0
    %1624 = vmatpush2.msra.mxu0 0.0
    %1625 = vmatprep.subr.mxu0 0.0
    %1626 = vmatpush2.msra.mxu0 0.0
    %1627 = vmatprep.subr.mxu0 0.0
    %1628 = vmatpush2.msra.mxu0 0.0
    %1629 = vmatprep.subr.mxu0 0.0
    %1630 = vmatpush2.msra.mxu0 0.0
    %1631 = vmatprep.subr.mxu0 0.0
    %1632 = vmatpush2.msra.mxu0 0.0
    %1633 = vmatprep.subr.mxu0 0.0
    %1634 = vmatpush2.msra.mxu0 0.0
    %1635 = vmatprep.mubr.f32.mxu0 0.0
    %1636 = vmatmul.mubr.f32.gmra.mxu0 %v1569
    %v1637 = vpop.f32.mrf.mxu0
    %v1638 = vadd.f32 0.0, %v1637
    %v1639 = vpop.f32.mrf.mxu0
    %1640 = vdwg.mxu0
    %v1642 = vsel %vm292, %v1129, 0
    %1644 = vmatprep.subr.mxu0 0.0
    %1645 = vmatpush1.msra.mxu0 0.0
    %1646 = vmatprep.subr.mxu0 0.0
    %1647 = vmatpush1.msra.mxu0 0.0
    %1648 = vmatprep.subr.mxu0 0.0
    %1649 = vmatpush1.msra.mxu0 0.0
    %1650 = vmatprep.subr.mxu0 0.0
    %1651 = vmatpush1.msra.mxu0 0.0
    %1652 = vmatprep.subr.mxu0 0.0
    %1653 = vmatpush1.msra.mxu0 0.0
    %1654 = vmatprep.subr.mxu0 0.0
    %1655 = vmatpush1.msra.mxu0 0.0
    %1656 = vmatprep.subr.mxu0 0.0
    %1657 = vmatpush1.msra.mxu0 0.0
    %1658 = vmatprep.subr.mxu0 0.0
    %1659 = vmatpush1.msra.mxu0 0.0
    %1660 = vmatprep.subr.mxu0 0.0
    %1661 = vmatpush1.msra.mxu0 0.0
    %1662 = vmatprep.subr.mxu0 0.0
    %1663 = vmatpush1.msra.mxu0 0.0
    %1664 = vmatprep.subr.mxu0 0.0
    %1665 = vmatpush1.msra.mxu0 0.0
    %1666 = vmatprep.subr.mxu0 0.0
    %1667 = vmatpush1.msra.mxu0 0.0
    %1668 = vmatprep.subr.mxu0 0.0
    %1669 = vmatpush1.msra.mxu0 0.0
    %1670 = vmatprep.subr.mxu0 0.0
    %1671 = vmatpush1.msra.mxu0 0.0
    %1672 = vmatprep.subr.mxu0 0.0
    %1673 = vmatpush1.msra.mxu0 0.0
    %1674 = vmatprep.subr.mxu0 0.0
    %1675 = vmatpush1.msra.mxu0 %v425
    %1676 = vmatprep.subr.mxu0 0.0
    %1677 = vmatpush2.msra.mxu0 0.0
    %1678 = vmatprep.subr.mxu0 0.0
    %1679 = vmatpush2.msra.mxu0 0.0
    %1680 = vmatprep.subr.mxu0 0.0
    %1681 = vmatpush2.msra.mxu0 0.0
    %1682 = vmatprep.subr.mxu0 0.0
    %1683 = vmatpush2.msra.mxu0 0.0
    %1684 = vmatprep.subr.mxu0 0.0
    %1685 = vmatpush2.msra.mxu0 0.0
    %1686 = vmatprep.subr.mxu0 0.0
    %1687 = vmatpush2.msra.mxu0 0.0
    %1688 = vmatprep.subr.mxu0 0.0
    %1689 = vmatpush2.msra.mxu0 0.0
    %1690 = vmatprep.subr.mxu0 0.0
    %1691 = vmatpush2.msra.mxu0 0.0
    %1692 = vmatprep.subr.mxu0 0.0
    %1693 = vmatpush2.msra.mxu0 0.0
    %1694 = vmatprep.subr.mxu0 0.0
    %1695 = vmatpush2.msra.mxu0 0.0
    %1696 = vmatprep.subr.mxu0 0.0
    %1697 = vmatpush2.msra.mxu0 0.0
    %1698 = vmatprep.subr.mxu0 0.0
    %1699 = vmatpush2.msra.mxu0 0.0
    %1700 = vmatprep.subr.mxu0 0.0
    %1701 = vmatpush2.msra.mxu0 0.0
    %1702 = vmatprep.subr.mxu0 0.0
    %1703 = vmatpush2.msra.mxu0 0.0
    %1704 = vmatprep.subr.mxu0 0.0
    %1705 = vmatpush2.msra.mxu0 0.0
    %1706 = vmatprep.subr.mxu0 0.0
    %1707 = vmatpush2.msra.mxu0 0.0
    %1708 = vmatprep.mubr.f32.mxu0 0.0
    %1709 = vmatmul.mubr.f32.gmra.mxu0 %v1642
    %v1710 = vpop.f32.mrf.mxu0
    %v1711 = vadd.f32 0.0, %v1710
    %v1712 = vpop.f32.mrf.mxu0
    %1713 = vdwg.mxu0
    %1714 = vst.msk [vmem:[#allocation5] sm:$0xff] %vm292, %v1200
    %1716 = vrot.lane.b32.xlu0 %v1273, 8
    %v1717 = vpop.permute.xlu0 %1716
    %vm1719 = vcmask 130112
    %1720 = vst.msk [vmem:[#allocation5] sm:$0xff] %vm1719, %v1717
    %1722 = vrot.lane.b32.xlu0 %v1346, 16
    %v1723 = vpop.permute.xlu0 %1722
    %vm1725 = vcmask 195712
    %1726 = vst.msk [vmem:[#allocation5] sm:$0xff] %vm1725, %v1723
    %1728 = vrot.lane.b32.xlu0 %v1419, 24
    %v1729 = vpop.permute.xlu0 %1728
    %vm1731 = vcmask 261312
    %1732 = vst.msk [vmem:[#allocation5] sm:$0xff] %vm1731, %v1729
    %1733 = vst.msk [vmem:[#allocation5 + $0x8] sm:$0xff] %vm292, %v1492
    %1735 = vrot.lane.b32.xlu0 %v1565, 8
    %v1736 = vpop.permute.xlu0 %1735
    %1738 = vst.msk [vmem:[#allocation5 + $0x8] sm:$0xff] %vm1719, %v1736
    %1740 = vrot.lane.b32.xlu0 %v1638, 16
    %v1741 = vpop.permute.xlu0 %1740
    %1743 = vst.msk [vmem:[#allocation5 + $0x8] sm:$0xff] %vm1725, %v1741
    %1745 = vrot.lane.b32.xlu0 %v1711, 24
    %v1746 = vpop.permute.xlu0 %1745
    %1748 = vst.msk [vmem:[#allocation5 + $0x8] sm:$0xff] %vm1731, %v1746
    %v1749 = vld [vmem:[#allocation5] sm:$0xff]
    %v1750 = vld [vmem:[#allocation5 + $0x8] sm:$0xff]
    %v1751 = vld [vmem:[%s8] sm:$0xff]
    %v1752 = vld [vmem:[%s8 + $0x8] sm:$0xff]
    %v1753 = vld [vmem:[%s8 + $0x10] sm:$0xff]
    %v1754 = vld [vmem:[%s8 + $0x18] sm:$0xff]
    %v1755 = vld [vmem:[%s9] sm:$0x1]
    %v1757 = vlaneseq
    %v1758 = vshrl.u32 %v1757, 7
    %v1759 = vsub.s32 0, %v1758
    %v1760 = vrot.slane %v1755, %v1759
    %v1763 = vsel %vm54, %v1749, 0
    %v1766 = vsel %vm54, %v1750, 0
    %1768 = vmatprep.subr.mxu0 0.0
    %1769 = vmatpush1.msra.mxu0 0.0
    %1770 = vmatprep.subr.mxu0 0.0
    %1771 = vmatpush1.msra.mxu0 0.0
    %1772 = vmatprep.subr.mxu0 0.0
    %1773 = vmatpush1.msra.mxu0 0.0
    %1774 = vmatprep.subr.mxu0 0.0
    %1775 = vmatpush1.msra.mxu0 0.0
    %1776 = vmatprep.subr.mxu0 0.0
    %1777 = vmatpush1.msra.mxu0 0.0
    %1778 = vmatprep.subr.mxu0 0.0
    %1779 = vmatpush1.msra.mxu0 0.0
    %1780 = vmatprep.subr.mxu0 0.0
    %1781 = vmatpush1.msra.mxu0 0.0
    %1782 = vmatprep.subr.mxu0 0.0
    %1783 = vmatpush1.msra.mxu0 0.0
    %1784 = vmatprep.subr.mxu0 0.0
    %1785 = vmatpush1.msra.mxu0 0.0
    %1786 = vmatprep.subr.mxu0 0.0
    %1787 = vmatpush1.msra.mxu0 0.0
    %1788 = vmatprep.subr.mxu0 0.0
    %1789 = vmatpush1.msra.mxu0 0.0
    %1790 = vmatprep.subr.mxu0 0.0
    %1791 = vmatpush1.msra.mxu0 0.0
    %1792 = vmatprep.subr.mxu0 0.0
    %1793 = vmatpush1.msra.mxu0 %v1754
    %1794 = vmatprep.subr.mxu0 0.0
    %1795 = vmatpush1.msra.mxu0 %v1753
    %1796 = vmatprep.subr.mxu0 0.0
    %1797 = vmatpush1.msra.mxu0 %v1752
    %1798 = vmatprep.subr.mxu0 0.0
    %1799 = vmatpush1.msra.mxu0 %v1751
    %1800 = vmatprep.subr.mxu0 0.0
    %1801 = vmatpush2.msra.mxu0 0.0
    %1802 = vmatprep.subr.mxu0 0.0
    %1803 = vmatpush2.msra.mxu0 0.0
    %1804 = vmatprep.subr.mxu0 0.0
    %1805 = vmatpush2.msra.mxu0 0.0
    %1806 = vmatprep.subr.mxu0 0.0
    %1807 = vmatpush2.msra.mxu0 0.0
    %1808 = vmatprep.subr.mxu0 0.0
    %1809 = vmatpush2.msra.mxu0 0.0
    %1810 = vmatprep.subr.mxu0 0.0
    %1811 = vmatpush2.msra.mxu0 0.0
    %1812 = vmatprep.subr.mxu0 0.0
    %1813 = vmatpush2.msra.mxu0 0.0
    %1814 = vmatprep.subr.mxu0 0.0
    %1815 = vmatpush2.msra.mxu0 0.0
    %1816 = vmatprep.subr.mxu0 0.0
    %1817 = vmatpush2.msra.mxu0 0.0
    %1818 = vmatprep.subr.mxu0 0.0
    %1819 = vmatpush2.msra.mxu0 0.0
    %1820 = vmatprep.subr.mxu0 0.0
    %1821 = vmatpush2.msra.mxu0 0.0
    %1822 = vmatprep.subr.mxu0 0.0
    %1823 = vmatpush2.msra.mxu0 0.0
    %1824 = vmatprep.subr.mxu0 0.0
    %1825 = vmatpush2.msra.mxu0 0.0
    %1826 = vmatprep.subr.mxu0 0.0
    %1827 = vmatpush2.msra.mxu0 0.0
    %1828 = vmatprep.subr.mxu0 0.0
    %1829 = vmatpush2.msra.mxu0 0.0
    %1830 = vmatprep.subr.mxu0 0.0
    %1831 = vmatpush2.msra.mxu0 0.0
    %1832 = vmatprep.mubr.f32.mxu0 0.0
    %1833 = vmatmul.mubr.f32.gmra.mxu0 %v1763
    %v1834 = vpop.f32.mrf.mxu0
    %v1835 = vadd.f32 %v1760, %v1834
    %v1836 = vpop.f32.mrf.mxu0
    %1837 = vmatprep.mubr.f32.mxu0 0.0
    %1838 = vmatmul.mubr.f32.gmra.mxu0 %v1766
    %v1839 = vpop.f32.mrf.mxu0
    %v1840 = vadd.f32 %v1760, %v1839
    %v1841 = vpop.f32.mrf.mxu0
    %1842 = vdwg.mxu0
    %v1843 = vadd.f32 %v1835, %v48
    %v1844 = vadd.f32 %v1840, %v49
    %v1845 = vld [vmem:[%s4] sm:$0x1]
    %v1846 = vld [vmem:[%s5] sm:$0x1]
    %v1847 = vsel %vm54, %v1843, 0.0
    %1848 = vadd.xlane.f32.xlu0 %v1847
    %v1849 = vpop.xlane.xlu0 %1848
    %v1850 = vsel %vm54, %v1844, 0.0
    %1851 = vadd.xlane.f32.xlu0 %v1850
    %v1852 = vpop.xlane.xlu0 %1851
    %v1853 = vmul.f32 %v1849, %v61
    %v1854 = vmul.f32 %v1852, %v61
    %v1855 = vsub.f32 %v1843, %v1853
    %v1856 = vsub.f32 %v1844, %v1854
    %v1857 = vmul.f32 %v1855, %v1855
    %v1858 = vmul.f32 %v1856, %v1856
    %v1859 = vsel %vm54, %v1857, 0.0
    %1860 = vadd.xlane.f32.xlu0 %v1859
    %v1861 = vpop.xlane.xlu0 %1860
    %v1862 = vsel %vm54, %v1858, 0.0
    %1863 = vadd.xlane.f32.xlu0 %v1862
    %v1864 = vpop.xlane.xlu0 %1863
    %v1865 = vmul.f32 %v1861, %v61
    %v1866 = vmul.f32 %v1864, %v61
    %v1867 = vadd.f32 %v1865, 1e-05
    %v1868 = vadd.f32 %v1866, 1e-05
    %v1869 = vrsqrt.pop %v1867
    %v1870 = vrsqrt.pop %v1868
    %v1871 = vmul.f32 %v1855, %v1869
    %v1872 = vmul.f32 %v1856, %v1870
    %v1874 = vlaneseq
    %v1875 = vshrl.u32 %v1874, 7
    %v1876 = vsub.s32 0, %v1875
    %v1877 = vrot.slane %v1845, %v1876
    %v1879 = vmul.f32 %v1871, %v1877
    %v1880 = vmul.f32 %v1872, %v1877
    %v1882 = vlaneseq
    %v1883 = vshrl.u32 %v1882, 7
    %v1884 = vsub.s32 0, %v1883
    %v1885 = vrot.slane %v1846, %v1884
    %v1887 = vadd.f32 %v1879, %v1885
    %v1888 = vadd.f32 %v1880, %v1885
    %v1889 = vld [vmem:[%s10] sm:$0xff]
    %v1890 = vld [vmem:[%s10 + $0x8] sm:$0xff]
    %v1891 = vld [vmem:[%s10 + $0x10] sm:$0xff]
    %v1892 = vld [vmem:[%s10 + $0x18] sm:$0xff]
    %v1893 = vld [vmem:[%s11] sm:$0x1]
    %v1895 = vlaneseq
    %v1896 = vshrl.u32 %v1895, 7
    %v1897 = vsub.s32 0, %v1896
    %v1898 = vrot.slane %v1893, %v1897
    %v1901 = vsel %vm54, %v1887, 0
    %v1904 = vsel %vm54, %v1888, 0
    %1906 = vmatprep.subr.mxu0 0.0
    %1907 = vmatpush1.msra.mxu0 0.0
    %1908 = vmatprep.subr.mxu0 0.0
    %1909 = vmatpush1.msra.mxu0 0.0
    %1910 = vmatprep.subr.mxu0 0.0
    %1911 = vmatpush1.msra.mxu0 0.0
    %1912 = vmatprep.subr.mxu0 0.0
    %1913 = vmatpush1.msra.mxu0 0.0
    %1914 = vmatprep.subr.mxu0 0.0
    %1915 = vmatpush1.msra.mxu0 0.0
    %1916 = vmatprep.subr.mxu0 0.0
    %1917 = vmatpush1.msra.mxu0 0.0
    %1918 = vmatprep.subr.mxu0 0.0
    %1919 = vmatpush1.msra.mxu0 0.0
    %1920 = vmatprep.subr.mxu0 0.0
    %1921 = vmatpush1.msra.mxu0 0.0
    %1922 = vmatprep.subr.mxu0 0.0
    %1923 = vmatpush1.msra.mxu0 0.0
    %1924 = vmatprep.subr.mxu0 0.0
    %1925 = vmatpush1.msra.mxu0 0.0
    %1926 = vmatprep.subr.mxu0 0.0
    %1927 = vmatpush1.msra.mxu0 0.0
    %1928 = vmatprep.subr.mxu0 0.0
    %1929 = vmatpush1.msra.mxu0 0.0
    %1930 = vmatprep.subr.mxu0 0.0
    %1931 = vmatpush1.msra.mxu0 %v1892
    %1932 = vmatprep.subr.mxu0 0.0
    %1933 = vmatpush1.msra.mxu0 %v1891
    %1934 = vmatprep.subr.mxu0 0.0
    %1935 = vmatpush1.msra.mxu0 %v1890
    %1936 = vmatprep.subr.mxu0 0.0
    %1937 = vmatpush1.msra.mxu0 %v1889
    %1938 = vmatprep.subr.mxu0 0.0
    %1939 = vmatpush2.msra.mxu0 0.0
    %1940 = vmatprep.subr.mxu0 0.0
    %1941 = vmatpush2.msra.mxu0 0.0
    %1942 = vmatprep.subr.mxu0 0.0
    %1943 = vmatpush2.msra.mxu0 0.0
    %1944 = vmatprep.subr.mxu0 0.0
    %1945 = vmatpush2.msra.mxu0 0.0
    %1946 = vmatprep.subr.mxu0 0.0
    %1947 = vmatpush2.msra.mxu0 0.0
    %1948 = vmatprep.subr.mxu0 0.0
    %1949 = vmatpush2.msra.mxu0 0.0
    %1950 = vmatprep.subr.mxu0 0.0
    %1951 = vmatpush2.msra.mxu0 0.0
    %1952 = vmatprep.subr.mxu0 0.0
    %1953 = vmatpush2.msra.mxu0 0.0
    %1954 = vmatprep.subr.mxu0 0.0
    %1955 = vmatpush2.msra.mxu0 0.0
    %1956 = vmatprep.subr.mxu0 0.0
    %1957 = vmatpush2.msra.mxu0 0.0
    %1958 = vmatprep.subr.mxu0 0.0
    %1959 = vmatpush2.msra.mxu0 0.0
    %1960 = vmatprep.subr.mxu0 0.0
    %1961 = vmatpush2.msra.mxu0 0.0
    %1962 = vmatprep.subr.mxu0 0.0
    %1963 = vmatpush2.msra.mxu0 0.0
    %1964 = vmatprep.subr.mxu0 0.0
    %1965 = vmatpush2.msra.mxu0 0.0
    %1966 = vmatprep.subr.mxu0 0.0
    %1967 = vmatpush2.msra.mxu0 0.0
    %1968 = vmatprep.subr.mxu0 0.0
    %1969 = vmatpush2.msra.mxu0 0.0
    %1970 = vmatprep.mubr.f32.mxu0 0.0
    %1971 = vmatmul.mubr.f32.gmra.mxu0 %v1901
    %v1972 = vpop.f32.mrf.mxu0
    %v1973 = vadd.f32 %v1898, %v1972
    %v1974 = vpop.f32.mrf.mxu0
    %1975 = vmatprep.mubr.f32.mxu0 0.0
    %1976 = vmatmul.mubr.f32.gmra.mxu0 %v1904
    %v1977 = vpop.f32.mrf.mxu0
    %v1978 = vadd.f32 %v1898, %v1977
    %v1979 = vpop.f32.mrf.mxu0
    %1980 = vdwg.mxu0
    %v1981 = vmul.f32 %v1973, 0.5
    %v1982 = vmul.f32 %v1978, 0.5
    %v1983 = vmul.f32 %v1973, 0.70710677
    %v1984 = vmul.f32 %v1978, 0.70710677
    %v1985 = verf.f32.pop %v1983
    %v1986 = verf.f32.pop %v1984
    %v1987 = vadd.f32 %v1985, 1.0
    %v1988 = vadd.f32 %v1986, 1.0
    %v1989 = vmul.f32 %v1981, %v1987
    %v1990 = vmul.f32 %v1982, %v1988
    %v1991 = vld [vmem:[%s12] sm:$0xff]
    %v1992 = vld [vmem:[%s12 + $0x8] sm:$0xff]
    %v1993 = vld [vmem:[%s12 + $0x10] sm:$0xff]
    %v1994 = vld [vmem:[%s12 + $0x18] sm:$0xff]
    %v1995 = vld [vmem:[%s12 + $0x20] sm:$0xff]
    %v1996 = vld [vmem:[%s12 + $0x28] sm:$0xff]
    %v1997 = vld [vmem:[%s12 + $0x30] sm:$0xff]
    %v1998 = vld [vmem:[%s12 + $0x38] sm:$0xff]
    %v1999 = vld [vmem:[%s12 + $0x40] sm:$0xff]
    %v2000 = vld [vmem:[%s12 + $0x48] sm:$0xff]
    %v2001 = vld [vmem:[%s12 + $0x50] sm:$0xff]
    %v2002 = vld [vmem:[%s12 + $0x58] sm:$0xff]
    %v2003 = vld [vmem:[%s12 + $0x60] sm:$0xff]
    %v2004 = vld [vmem:[%s12 + $0x68] sm:$0xff]
    %v2005 = vld [vmem:[%s12 + $0x70] sm:$0xff]
    %v2006 = vld [vmem:[%s12 + $0x78] sm:$0xff]
    %v2007 = vld [vmem:[%s13] sm:$0x1]
    %v2009 = vlaneseq
    %v2010 = vshrl.u32 %v2009, 7
    %v2011 = vsub.s32 0, %v2010
    %v2012 = vrot.slane %v2007, %v2011
    %2014 = vmatprep.subr.mxu0 0.0
    %2015 = vmatpush1.msra.mxu0 %v2006
    %2016 = vmatprep.subr.mxu0 0.0
    %2017 = vmatpush1.msra.mxu0 %v2005
    %2018 = vmatprep.subr.mxu0 0.0
    %2019 = vmatpush1.msra.mxu0 %v2004
    %2020 = vmatprep.subr.mxu0 0.0
    %2021 = vmatpush1.msra.mxu0 %v2003
    %2022 = vmatprep.subr.mxu0 0.0
    %2023 = vmatpush1.msra.mxu0 %v2002
    %2024 = vmatprep.subr.mxu0 0.0
    %2025 = vmatpush1.msra.mxu0 %v2001
    %2026 = vmatprep.subr.mxu0 0.0
    %2027 = vmatpush1.msra.mxu0 %v2000
    %2028 = vmatprep.subr.mxu0 0.0
    %2029 = vmatpush1.msra.mxu0 %v1999
    %2030 = vmatprep.subr.mxu0 0.0
    %2031 = vmatpush1.msra.mxu0 %v1998
    %2032 = vmatprep.subr.mxu0 0.0
    %2033 = vmatpush1.msra.mxu0 %v1997
    %2034 = vmatprep.subr.mxu0 0.0
    %2035 = vmatpush1.msra.mxu0 %v1996
    %2036 = vmatprep.subr.mxu0 0.0
    %2037 = vmatpush1.msra.mxu0 %v1995
    %2038 = vmatprep.subr.mxu0 0.0
    %2039 = vmatpush1.msra.mxu0 %v1994
    %2040 = vmatprep.subr.mxu0 0.0
    %2041 = vmatpush1.msra.mxu0 %v1993
    %2042 = vmatprep.subr.mxu0 0.0
    %2043 = vmatpush1.msra.mxu0 %v1992
    %2044 = vmatprep.subr.mxu0 0.0
    %2045 = vmatpush1.msra.mxu0 %v1991
    %2046 = vmatprep.subr.mxu0 0.0
    %2047 = vmatpush2.msra.mxu0 0.0
    %2048 = vmatprep.subr.mxu0 0.0
    %2049 = vmatpush2.msra.mxu0 0.0
    %2050 = vmatprep.subr.mxu0 0.0
    %2051 = vmatpush2.msra.mxu0 0.0
    %2052 = vmatprep.subr.mxu0 0.0
    %2053 = vmatpush2.msra.mxu0 0.0
    %2054 = vmatprep.subr.mxu0 0.0
    %2055 = vmatpush2.msra.mxu0 0.0
    %2056 = vmatprep.subr.mxu0 0.0
    %2057 = vmatpush2.msra.mxu0 0.0
    %2058 = vmatprep.subr.mxu0 0.0
    %2059 = vmatpush2.msra.mxu0 0.0
    %2060 = vmatprep.subr.mxu0 0.0
    %2061 = vmatpush2.msra.mxu0 0.0
    %2062 = vmatprep.subr.mxu0 0.0
    %2063 = vmatpush2.msra.mxu0 0.0
    %2064 = vmatprep.subr.mxu0 0.0
    %2065 = vmatpush2.msra.mxu0 0.0
    %2066 = vmatprep.subr.mxu0 0.0
    %2067 = vmatpush2.msra.mxu0 0.0
    %2068 = vmatprep.subr.mxu0 0.0
    %2069 = vmatpush2.msra.mxu0 0.0
    %2070 = vmatprep.subr.mxu0 0.0
    %2071 = vmatpush2.msra.mxu0 0.0
    %2072 = vmatprep.subr.mxu0 0.0
    %2073 = vmatpush2.msra.mxu0 0.0
    %2074 = vmatprep.subr.mxu0 0.0
    %2075 = vmatpush2.msra.mxu0 0.0
    %2076 = vmatprep.subr.mxu0 0.0
    %2077 = vmatpush2.msra.mxu0 0.0
    %2078 = vmatprep.mubr.f32.mxu0 0.0
    %2079 = vmatmul.mubr.f32.gmra.mxu0 %v1989
    %v2080 = vpop.f32.mrf.mxu0
    %v2081 = vadd.f32 %v2012, %v2080
    %v2082 = vpop.f32.mrf.mxu0
    %2083 = vmatprep.mubr.f32.mxu0 0.0
    %2084 = vmatmul.mubr.f32.gmra.mxu0 %v1990
    %v2085 = vpop.f32.mrf.mxu0
    %v2086 = vadd.f32 %v2012, %v2085
    %v2087 = vpop.f32.mrf.mxu0
    %2088 = vdwg.mxu0
    %v2089 = vadd.f32 %v2081, %v1843
    %v2090 = vadd.f32 %v2086, %v1844
    %2091 = vst.msk [vmem:[#allocation6] sm:$0xff] %vm54, %v2089
    %2092 = vst.msk [vmem:[#allocation6 + $0x8] sm:$0xff] %vm54, %v2090
    // Predicated region
    $region58: #{tpu_custom_call.1} parent=1 // pred_check
      _
    $region59: #{tpu_custom_call.1} parent=1 // pred_check_branch
      %2094 = sbr.rel (0) target = $region61
    $region60: #{tpu_custom_call.1} parent=1 // pred_region
      %s2096 = ssub.s32 256, 256
      %2097 = vsyncadd [#allocation7], %s2096
      %s2098 = sshll.u32 [#allocation6], 4
      %s2099 = int_to_ptr.vmem [resolvable:$true] %s2098
      %2104 = dma.vmem_to_hbm [thread:$0]  %s2099, 256, %s14, [#allocation7], 128, 128, 8
    $region61: #{tpu_custom_call.1} parent=1 // pred_fallthru
      _
    // Predicated region
    $region62: #{tpu_custom_call.1} parent=1 // pred_check
      _
    $region63: #{tpu_custom_call.1} parent=1 // pred_check_branch
      %2106 = sbr.rel (0) target = $region65
    $region64: #{tpu_custom_call.1} parent=1 // pred_region
      %2107 = dma.done [#allocation7], 256
    $region65: #{tpu_custom_call.1} parent=1 // pred_fallthru
      _
    %2108 = vsyncpa [#allocation7], 1

</llo_original>
